<compile_context>
chip_gen: v6e
topology: v6e:2x2x1
jax: 0.10.0
libtpu: 0.0.40
codegen_flags: <defaults>
</compile_context>

<pallas_src>
import functools
import math

import numpy as np
import jax
import jax.numpy as jnp
from jax import lax
from jax.experimental import pallas as pl
from jax.experimental.pallas import tpu as pltpu


# Finite stand-in for -inf: keeps window-max semantics but avoids 0 * inf = NaN
# in the 0/1 selection matmul that consumes the window-max slab.
_NEG_LARGE = -1.0e30


def _pad_border_zero(p):
    """Zero-pad a small 2D in-register value by 1 on every side (no scratch)."""
    r, s = p.shape
    zr = jnp.zeros((1, s), p.dtype)
    p = jnp.concatenate([zr, p, zr], axis=0)             # (r+2, s)
    zc = jnp.zeros((r + 2, 1), p.dtype)
    return jnp.concatenate([zc, p, zc], axis=1)          # (r+2, s+2)


def _conv3x3(planes, taps, transpose_taps):
    """3x3 'same' conv (2 in-ch -> 1 out-ch) on small in-register planes.

    planes: (max_plane, mean_plane), each (R, S).
    taps:   18 scalars laid out as ic*9 + ky*3 + kx (PyTorch OIHW order).
    transpose_taps: swap ky/kx (used when the plane is kept transposed).
    """
    r, s = planes[0].shape
    acc = jnp.zeros((r, s), jnp.float32)
    for ic, plane in enumerate(planes):
        pp = _pad_border_zero(plane)
        for a in range(3):              # tap along axis 0 of the plane
            for b in range(3):          # tap along axis 1 of the plane
                k = (b * 3 + a) if transpose_taps else (a * 3 + b)
                acc = acc + taps[ic * 9 + k] * pp[a:a + r, b:b + s]
    return acc


def _pool_over_rows(g, H, W):
    """(max, sum) over the H groups of W contiguous lanes: (C, H*W) -> (C, W).

    log2(H)-depth tree over contiguous halves of the flat HW axis (row h pairs
    with row h + Hc//2) instead of H serial misaligned W-wide slices.
    """
    mx, sm = g, g
    rem_mx = rem_sm = None
    Hc = H
    while Hc > 1:
        if Hc % 2 == 1:                      # peel the trailing odd row
            cut = (Hc - 1) * W
            tmx, tsm = mx[:, cut:], sm[:, cut:]
            rem_mx = tmx if rem_mx is None else jnp.maximum(rem_mx, tmx)
            rem_sm = tsm if rem_sm is None else rem_sm + tsm
            Hc -= 1
            mx, sm = mx[:, :cut], sm[:, :cut]
        half = (Hc // 2) * W
        mx = jnp.maximum(mx[:, :half], mx[:, half:])
        sm = sm[:, :half] + sm[:, half:]
        Hc //= 2
    if rem_mx is not None:
        mx = jnp.maximum(mx, rem_mx)
        sm = sm + rem_sm
    return mx, sm


def _window_max(y, W):
    """z[:, i] = max(y[:, i:i+W]) wherever the window stays in range.

    Doubling trick: log2(W)+1 shift-and-max passes over the full (C, HW) slab
    (shift-in a large negative finite fill), replacing H per-segment XLU lane
    reductions + H width-1 concatenates.
    """
    c = y.shape[0]

    def shift_left(v, p):
        fill = jnp.full((c, p), _NEG_LARGE, v.dtype)
        return jnp.concatenate([v[:, p:], fill], axis=1)

    z = y
    p = 1
    while p * 2 <= W:
        z = jnp.maximum(z, shift_left(z, p))
        p *= 2
    if p < W:
        z = jnp.maximum(z, shift_left(z, W - p))
    return z


def _lfa_kernel(x_ref, fc_w_ref, fc_b_ref, pool_hc_ref, sel_hc_ref,
                exp_cw_ref, exp_hc_ref, cw_w_ref, cw_bn_ref,
                hc_w_ref, hc_bn_ref, o_ref, *, H, W):
    x = x_ref[0]                                          # (C, H*W) lane-dense

    # ---- fc 1x1 conv (MXU, f32 accumulate) + sigmoid gate --------------------
    # AdaptiveAvg/MaxPool2d to the input's own (H,W) are identities, so
    # x1 + x2 == 2 * x * sigmoid(fc(x)).
    logits = jnp.dot(fc_w_ref[...], x, preferred_element_type=jnp.float32)
    logits = logits + fc_b_ref[...]                       # (C, 1) broadcast
    g = 2.0 * x.astype(jnp.float32) * jax.nn.sigmoid(logits)   # (C, HW) f32

    # ---- cw pools over H (tree reduce) -> (C, W) ------------------------------
    mx_cw, sm_cw = _pool_over_rows(g, H, W)
    mn_cw = sm_cw * (1.0 / H)

    # ---- hc pools over W -> (C, H) --------------------------------------------
    #   mean: one MXU matmul with a constant (HW, H) block-sum matrix.
    #   max : shift+max window pass, then a constant 0/1 selection matmul.
    mn_hc = jnp.dot(g, pool_hc_ref[...],
                    preferred_element_type=jnp.float32) * (1.0 / W)
    zwin = _window_max(g, W)
    mx_hc = jnp.dot(zwin, sel_hc_ref[...], preferred_element_type=jnp.float32)

    # ---- 3x3 convs + folded BN + sigmoid --------------------------------------
    cw_taps = [cw_w_ref[i] for i in range(18)]            # hoisted SMEM reads
    hc_taps = [hc_w_ref[i] for i in range(18)]
    conv_cw = _conv3x3((mx_cw, mn_cw), cw_taps, transpose_taps=False)
    scale_cw = jax.nn.sigmoid(conv_cw * cw_bn_ref[0] + cw_bn_ref[1])   # (C, W)
    conv_hc = _conv3x3((mx_hc, mn_hc), hc_taps, transpose_taps=True)
    scale_hc = jax.nn.sigmoid(conv_hc * hc_bn_ref[0] + hc_bn_ref[1])   # (C, H)

    # ---- combine on the MXU: comb[c, h*W+w] = scale_cw[c,w] + scale_hc[c,h] ---
    comb = (jnp.dot(scale_cw, exp_cw_ref[...], preferred_element_type=jnp.float32)
            + jnp.dot(scale_hc, exp_hc_ref[...], preferred_element_type=jnp.float32))
    o_ref[0] = (0.5 * g * comb).astype(o_ref.dtype)       # one dense bulk store


def lfa_pallas(x, fc_w, fc_b, cw_w, cw_bn, hc_w, hc_bn):
    B, C, H, W = x.shape
    HW = H * W
    dt = x.dtype
    elt = jnp.dtype(dt).itemsize

    # Free, layout-preserving reshape; no wrapper-side pad / cast / slice of the
    # activation tensor (each of those would be an extra full HBM pass).
    x_flat = x.reshape(B, C, HW)

    # Small parameters (tiny; cast on the host is negligible).
    fc_w = fc_w.astype(dt)                                 # bf16 in -> bf16 MXU
    fc_b = fc_b.astype(jnp.float32).reshape(C, 1)

    # Constant 0/1 matrices letting the otherwise-idle MXU do the hc mean pool,
    # the hc max-column selection, and the final broadcast-combine expansion.
    i_idx = np.arange(HW)
    h_ids = np.arange(H)
    w_ids = np.arange(W)
    pool_hc = (i_idx[:, None] // W == h_ids[None, :]).astype(np.float32)   # (HW, H)
    sel_hc = (i_idx[:, None] == (h_ids * W)[None, :]).astype(np.float32)   # (HW, H)
    exp_cw = (w_ids[:, None] == (i_idx % W)[None, :]).astype(np.float32)   # (W, HW)
    exp_hc = np.ascontiguousarray(pool_hc.T)                               # (H, HW)

    # VMEM budget sized from the real footprint (x/out double-buffered, the
    # resident constants, and f32 working slabs), clamped to [32 MiB, 64 MiB].
    const_bytes = 4 * (pool_hc.size + sel_hc.size + exp_cw.size + exp_hc.size)
    slab_f32 = C * HW * 4
    footprint = (4 * C * HW * elt + 2 * const_bytes + 2 * C * C * elt
                 + 8 * slab_f32)
    vmem_limit = int(min(max(footprint, 32 * 1024 * 1024), 64 * 1024 * 1024))

    # Advisory cost estimate so XLA schedules/overlaps the call sensibly.
    flops = int(B * (2 * C * C * HW                 # fc matmul
                     + 4 * C * HW * H               # hc mean-pool + max-select
                     + 2 * C * HW * (H + W)         # expansion matmuls
                     + 16 * C * HW))                # VPU gate/pool/combine
    transc = int(B * (C * HW + C * W + C * H))      # sigmoids
    bytes_acc = int(2 * B * C * HW * elt + const_bytes + (C * C + C) * 4 + 160)
    cost = pl.CostEstimate(flops=flops, transcendentals=transc,
                           bytes_accessed=bytes_acc)

    kernel = functools.partial(_lfa_kernel, H=H, W=W)
    smem = lambda: pl.BlockSpec(memory_space=pltpu.MemorySpace.SMEM)
    const2d = lambda shape: pl.BlockSpec(shape, lambda b: (0, 0))

    out_flat = pl.pallas_call(
        kernel,
        out_shape=jax.ShapeDtypeStruct((B, C, HW), dt),
        grid=(B,),
        in_specs=[
            pl.BlockSpec((1, C, HW), lambda b: (b, 0, 0)),   # x (lane-dense)
            const2d((C, C)),                                 # fc weight (VMEM, MXU)
            const2d((C, 1)),                                 # fc bias
            const2d((HW, H)),                                # hc mean-pool matrix
            const2d((HW, H)),                                # hc max-select matrix
            const2d((W, HW)),                                # cw expansion matrix
            const2d((H, HW)),                                # hc expansion matrix
            smem(), smem(), smem(), smem(),                  # conv taps + BN pairs
        ],
        out_specs=pl.BlockSpec((1, C, HW), lambda b: (b, 0, 0)),
        compiler_params=pltpu.CompilerParams(
            dimension_semantics=("parallel",),               # megacore on v7x
            vmem_limit_bytes=vmem_limit),
        cost_estimate=cost,
    )(x_flat, fc_w, fc_b,
      jnp.asarray(pool_hc), jnp.asarray(sel_hc),
      jnp.asarray(exp_cw), jnp.asarray(exp_hc),
      cw_w.reshape(-1).astype(jnp.float32), cw_bn.astype(jnp.float32),
      hc_w.reshape(-1).astype(jnp.float32), hc_bn.astype(jnp.float32))
    return out_flat.reshape(B, C, H, W)


def lfa_reference(x, fc_w, fc_b, cw_w, cw_bn, hc_w, hc_bn):
    """Pure-JAX reference mirroring the PyTorch forward (f32)."""
    y = jnp.einsum('ck,bkhw->bchw', fc_w, x) + fc_b[None, :, None, None]
    s = jax.nn.sigmoid(y)
    xg = x * s + x * s

    def att_gate(t, w, bn):                 # pool over axis 1, conv over last 2
        comp = jnp.stack([jnp.max(t, axis=1), jnp.mean(t, axis=1)], axis=1)
        conv = lax.conv_general_dilated(
            comp, w[None], window_strides=(1, 1), padding=((1, 1), (1, 1)),
            dimension_numbers=('NCHW', 'OIHW', 'NCHW'))
        conv = conv * bn[0] + bn[1]
        return t * jax.nn.sigmoid(conv)

    xp1 = jnp.transpose(xg, (0, 2, 1, 3))
    o11 = jnp.transpose(att_gate(xp1, cw_w, cw_bn), (0, 2, 1, 3))
    xp2 = jnp.transpose(xg, (0, 3, 2, 1))
    o21 = jnp.transpose(att_gate(xp2, hc_w, hc_bn), (0, 3, 2, 1))
    return 0.5 * (o11 + o21)


if __name__ == "__main__":
    B, C, H, W = 2, 4, 16, 16
    key = jax.random.PRNGKey(0)
    ks = jax.random.split(key, 5)

    x = jax.random.normal(ks[0], (B, C, H, W), jnp.float32)
    # Deterministic synthetic parameters (shapes match the PyTorch module).
    fc_w = jax.random.normal(ks[1], (C, C), jnp.float32) * 0.3     # Conv2d(C,C,1) weight
    fc_b = jax.random.normal(ks[2], (C,), jnp.float32) * 0.1       # fc bias
    cw_w = jax.random.normal(ks[3], (2, 3, 3), jnp.float32) * 0.3  # cw BasicConv weight (1,2,3,3)
    hc_w = jax.random.normal(ks[4], (2, 3, 3), jnp.float32) * 0.3  # hc BasicConv weight (1,2,3,3)

    # Fold BatchNorm2d(1) (eval mode, default stats) into scale/shift.
    eps = 1e-5
    gamma, beta, rmean, rvar = 1.0, 0.0, 0.0, 1.0
    bn_scale = gamma / math.sqrt(rvar + eps)
    bn_shift = beta - rmean * bn_scale
    cw_bn = jnp.array([bn_scale, bn_shift], jnp.float32)
    hc_bn = jnp.array([bn_scale, bn_shift], jnp.float32)

    # f32 run: exact check against the pure-JAX reference.
    out = lfa_pallas(x, fc_w, fc_b, cw_w, cw_bn, hc_w, hc_bn)
    out = jax.block_until_ready(out)
    ref = lfa_reference(x, fc_w, fc_b, cw_w, cw_bn, hc_w, hc_bn)
    err = float(jnp.max(jnp.abs(out - ref)))
    assert out.shape == (B, C, H, W)
    assert jnp.allclose(out, ref, atol=1e-4, rtol=1e-4), f"max abs err {err}"

    # bf16 HBM I/O smoke run (halves the memory traffic on the real workload).
    out_bf16 = lfa_pallas(x.astype(jnp.bfloat16), fc_w, fc_b,
                          cw_w, cw_bn, hc_w, hc_bn)
    out_bf16 = jax.block_until_ready(out_bf16)
    assert out_bf16.shape == (B, C, H, W)
    assert out_bf16.dtype == jnp.bfloat16
    assert bool(jnp.all(jnp.isfinite(out_bf16.astype(jnp.float32))))

    print("KERNEL_OK")
</pallas_src>

<mosaic_0001>
module attributes {stable_mosaic.version = 11 : i64} {
  func.func @_lfa_kernel(%arg0: i32, %arg1: memref<1x4x256xf32, #tpu.memory_space<vmem>>, %arg2: memref<4x4xf32, #tpu.memory_space<vmem>>, %arg3: memref<4x1xf32, #tpu.memory_space<vmem>>, %arg4: memref<256x16xf32, #tpu.memory_space<vmem>>, %arg5: memref<256x16xf32, #tpu.memory_space<vmem>>, %arg6: memref<16x256xf32, #tpu.memory_space<vmem>>, %arg7: memref<16x256xf32, #tpu.memory_space<vmem>>, %arg8: memref<18xf32, #tpu.memory_space<smem>>, %arg9: memref<2xf32, #tpu.memory_space<smem>>, %arg10: memref<18xf32, #tpu.memory_space<smem>>, %arg11: memref<2xf32, #tpu.memory_space<smem>>, %arg12: memref<1x4x256xf32, #tpu.memory_space<vmem>>) attributes {dimension_semantics = [#tpu.dimension_semantics<parallel>], iteration_bounds = array<i64: 2>, scalar_prefetch = 0 : i64, scratch_operands = 0 : i64, tpu.core_type = #tpu.core_type<tc>, window_params = [{transform_indices = @transform_0, window_bounds = array<i64: 1, 4, 256>}, {pipeline_mode = #tpu.pipeline_mode<synchronous>, transform_indices = @transform_1, window_bounds = array<i64: 4, 4>}, {pipeline_mode = #tpu.pipeline_mode<synchronous>, transform_indices = @transform_2, window_bounds = array<i64: 4, 1>}, {pipeline_mode = #tpu.pipeline_mode<synchronous>, transform_indices = @transform_3, window_bounds = array<i64: 256, 16>}, {pipeline_mode = #tpu.pipeline_mode<synchronous>, transform_indices = @transform_4, window_bounds = array<i64: 256, 16>}, {pipeline_mode = #tpu.pipeline_mode<synchronous>, transform_indices = @transform_5, window_bounds = array<i64: 16, 256>}, {pipeline_mode = #tpu.pipeline_mode<synchronous>, transform_indices = @transform_6, window_bounds = array<i64: 16, 256>}, {transform_indices = @transform_7, window_bounds = array<i64: 18>}, {transform_indices = @transform_8, window_bounds = array<i64: 2>}, {transform_indices = @transform_9, window_bounds = array<i64: 18>}, {transform_indices = @transform_10, window_bounds = array<i64: 2>}, {transform_indices = @transform_11, window_bounds = array<i64: 1, 4, 256>}]} {
    %c0 = arith.constant 0 : index
    %c0_0 = arith.constant 0 : index
    %c0_1 = arith.constant 0 : index
    %0 = vector.load %arg1[%c0, %c0_0, %c0_1] : memref<1x4x256xf32, #tpu.memory_space<vmem>>, vector<1x4x256xf32>
    %1 = vector.shape_cast %0 : vector<1x4x256xf32> to vector<4x256xf32>
    %c0_2 = arith.constant 0 : index
    %c0_3 = arith.constant 0 : index
    %2 = vector.load %arg2[%c0_2, %c0_3] : memref<4x4xf32, #tpu.memory_space<vmem>>, vector<4x4xf32>
    %cst = arith.constant dense<0.000000e+00> : vector<4x256xf32>
    %3 = tpu.matmul %2, %1, %cst {dimension_numbers = #tpu.dot_dimension_numbers<[1], [0], [0], [1], [0, 0, 1, 1], [], []>} : vector<4x4xf32>, vector<4x256xf32>, vector<4x256xf32> -> vector<4x256xf32>
    %c0_4 = arith.constant 0 : index
    %c0_5 = arith.constant 0 : index
    %4 = vector.load %arg3[%c0_4, %c0_5] : memref<4x1xf32, #tpu.memory_space<vmem>>, vector<4x1xf32>
    %5 = vector.broadcast %4 : vector<4x1xf32> to vector<4x256xf32>
    %6 = arith.addf %3, %5 : vector<4x256xf32>
    %cst_6 = arith.constant 2.000000e+00 : f32
    %7 = vector.broadcast %cst_6 : f32 to vector<4x256xf32>
    %8 = arith.mulf %7, %1 : vector<4x256xf32>
    %9 = arith.negf %6 : vector<4x256xf32>
    %10 = math.exp %9 : vector<4x256xf32>
    %cst_7 = arith.constant 1.000000e+00 : f32
    %11 = vector.broadcast %cst_7 : f32 to vector<4x256xf32>
    %12 = arith.addf %11, %10 : vector<4x256xf32>
    %13 = arith.divf %11, %12 : vector<4x256xf32>
    %14 = arith.mulf %8, %13 : vector<4x256xf32>
    %15 = vector.extract_strided_slice %14 {offsets = [0, 0], sizes = [4, 128], strides = [1, 1]} : vector<4x256xf32> to vector<4x128xf32>
    %16 = vector.extract_strided_slice %14 {offsets = [0, 128], sizes = [4, 128], strides = [1, 1]} : vector<4x256xf32> to vector<4x128xf32>
    %17 = arith.maximumf %15, %16 : vector<4x128xf32>
    %18 = vector.extract_strided_slice %14 {offsets = [0, 0], sizes = [4, 128], strides = [1, 1]} : vector<4x256xf32> to vector<4x128xf32>
    %19 = vector.extract_strided_slice %14 {offsets = [0, 128], sizes = [4, 128], strides = [1, 1]} : vector<4x256xf32> to vector<4x128xf32>
    %20 = arith.addf %18, %19 : vector<4x128xf32>
    %21 = vector.extract_strided_slice %17 {offsets = [0, 0], sizes = [4, 64], strides = [1, 1]} : vector<4x128xf32> to vector<4x64xf32>
    %22 = vector.extract_strided_slice %17 {offsets = [0, 64], sizes = [4, 64], strides = [1, 1]} : vector<4x128xf32> to vector<4x64xf32>
    %23 = arith.maximumf %21, %22 : vector<4x64xf32>
    %24 = vector.extract_strided_slice %20 {offsets = [0, 0], sizes = [4, 64], strides = [1, 1]} : vector<4x128xf32> to vector<4x64xf32>
    %25 = vector.extract_strided_slice %20 {offsets = [0, 64], sizes = [4, 64], strides = [1, 1]} : vector<4x128xf32> to vector<4x64xf32>
    %26 = arith.addf %24, %25 : vector<4x64xf32>
    %27 = vector.extract_strided_slice %23 {offsets = [0, 0], sizes = [4, 32], strides = [1, 1]} : vector<4x64xf32> to vector<4x32xf32>
    %28 = vector.extract_strided_slice %23 {offsets = [0, 32], sizes = [4, 32], strides = [1, 1]} : vector<4x64xf32> to vector<4x32xf32>
    %29 = arith.maximumf %27, %28 : vector<4x32xf32>
    %30 = vector.extract_strided_slice %26 {offsets = [0, 0], sizes = [4, 32], strides = [1, 1]} : vector<4x64xf32> to vector<4x32xf32>
    %31 = vector.extract_strided_slice %26 {offsets = [0, 32], sizes = [4, 32], strides = [1, 1]} : vector<4x64xf32> to vector<4x32xf32>
    %32 = arith.addf %30, %31 : vector<4x32xf32>
    %33 = vector.extract_strided_slice %29 {offsets = [0, 0], sizes = [4, 16], strides = [1, 1]} : vector<4x32xf32> to vector<4x16xf32>
    %34 = vector.extract_strided_slice %29 {offsets = [0, 16], sizes = [4, 16], strides = [1, 1]} : vector<4x32xf32> to vector<4x16xf32>
    %35 = arith.maximumf %33, %34 : vector<4x16xf32>
    %36 = vector.extract_strided_slice %32 {offsets = [0, 0], sizes = [4, 16], strides = [1, 1]} : vector<4x32xf32> to vector<4x16xf32>
    %37 = vector.extract_strided_slice %32 {offsets = [0, 16], sizes = [4, 16], strides = [1, 1]} : vector<4x32xf32> to vector<4x16xf32>
    %38 = arith.addf %36, %37 : vector<4x16xf32>
    %cst_8 = arith.constant 6.250000e-02 : f32
    %39 = vector.broadcast %cst_8 : f32 to vector<4x16xf32>
    %40 = arith.mulf %38, %39 : vector<4x16xf32>
    %c0_9 = arith.constant 0 : index
    %c0_10 = arith.constant 0 : index
    %41 = vector.load %arg4[%c0_9, %c0_10] : memref<256x16xf32, #tpu.memory_space<vmem>>, vector<256x16xf32>
    %cst_11 = arith.constant dense<0.000000e+00> : vector<4x16xf32>
    %42 = tpu.matmul %14, %41, %cst_11 {dimension_numbers = #tpu.dot_dimension_numbers<[1], [0], [0], [1], [0, 0, 1, 1], [], []>} : vector<4x256xf32>, vector<256x16xf32>, vector<4x16xf32> -> vector<4x16xf32>
    %cst_12 = arith.constant 6.250000e-02 : f32
    %43 = vector.broadcast %cst_12 : f32 to vector<4x16xf32>
    %44 = arith.mulf %42, %43 : vector<4x16xf32>
    %cst_13 = arith.constant -1.000000e+30 : f32
    %45 = vector.broadcast %cst_13 : f32 to vector<4x1xf32>
    %46 = vector.extract_strided_slice %14 {offsets = [0, 1], sizes = [4, 255], strides = [1, 1]} : vector<4x256xf32> to vector<4x255xf32>
    %47 = tpu.concatenate %46, %45 in 1 : vector<4x255xf32>, vector<4x1xf32> -> vector<4x256xf32>
    %48 = arith.maximumf %14, %47 : vector<4x256xf32>
    %cst_14 = arith.constant -1.000000e+30 : f32
    %49 = vector.broadcast %cst_14 : f32 to vector<4x2xf32>
    %50 = vector.extract_strided_slice %48 {offsets = [0, 2], sizes = [4, 254], strides = [1, 1]} : vector<4x256xf32> to vector<4x254xf32>
    %51 = tpu.concatenate %50, %49 in 1 : vector<4x254xf32>, vector<4x2xf32> -> vector<4x256xf32>
    %52 = arith.maximumf %48, %51 : vector<4x256xf32>
    %cst_15 = arith.constant -1.000000e+30 : f32
    %53 = vector.broadcast %cst_15 : f32 to vector<4x4xf32>
    %54 = vector.extract_strided_slice %52 {offsets = [0, 4], sizes = [4, 252], strides = [1, 1]} : vector<4x256xf32> to vector<4x252xf32>
    %55 = tpu.concatenate %54, %53 in 1 : vector<4x252xf32>, vector<4x4xf32> -> vector<4x256xf32>
    %56 = arith.maximumf %52, %55 : vector<4x256xf32>
    %cst_16 = arith.constant -1.000000e+30 : f32
    %57 = vector.broadcast %cst_16 : f32 to vector<4x8xf32>
    %58 = vector.extract_strided_slice %56 {offsets = [0, 8], sizes = [4, 248], strides = [1, 1]} : vector<4x256xf32> to vector<4x248xf32>
    %59 = tpu.concatenate %58, %57 in 1 : vector<4x248xf32>, vector<4x8xf32> -> vector<4x256xf32>
    %60 = arith.maximumf %56, %59 : vector<4x256xf32>
    %c0_17 = arith.constant 0 : index
    %c0_18 = arith.constant 0 : index
    %61 = vector.load %arg5[%c0_17, %c0_18] : memref<256x16xf32, #tpu.memory_space<vmem>>, vector<256x16xf32>
    %cst_19 = arith.constant dense<0.000000e+00> : vector<4x16xf32>
    %62 = tpu.matmul %60, %61, %cst_19 {dimension_numbers = #tpu.dot_dimension_numbers<[1], [0], [0], [1], [0, 0, 1, 1], [], []>} : vector<4x256xf32>, vector<256x16xf32>, vector<4x16xf32> -> vector<4x16xf32>
    %c0_20 = arith.constant 0 : index
    %63 = memref.load %arg8[%c0_20] : memref<18xf32, #tpu.memory_space<smem>>
    %c1 = arith.constant 1 : index
    %64 = memref.load %arg8[%c1] : memref<18xf32, #tpu.memory_space<smem>>
    %c2 = arith.constant 2 : index
    %65 = memref.load %arg8[%c2] : memref<18xf32, #tpu.memory_space<smem>>
    %c3 = arith.constant 3 : index
    %66 = memref.load %arg8[%c3] : memref<18xf32, #tpu.memory_space<smem>>
    %c4 = arith.constant 4 : index
    %67 = memref.load %arg8[%c4] : memref<18xf32, #tpu.memory_space<smem>>
    %c5 = arith.constant 5 : index
    %68 = memref.load %arg8[%c5] : memref<18xf32, #tpu.memory_space<smem>>
    %c6 = arith.constant 6 : index
    %69 = memref.load %arg8[%c6] : memref<18xf32, #tpu.memory_space<smem>>
    %c7 = arith.constant 7 : index
    %70 = memref.load %arg8[%c7] : memref<18xf32, #tpu.memory_space<smem>>
    %c8 = arith.constant 8 : index
    %71 = memref.load %arg8[%c8] : memref<18xf32, #tpu.memory_space<smem>>
    %c9 = arith.constant 9 : index
    %72 = memref.load %arg8[%c9] : memref<18xf32, #tpu.memory_space<smem>>
    %c10 = arith.constant 10 : index
    %73 = memref.load %arg8[%c10] : memref<18xf32, #tpu.memory_space<smem>>
    %c11 = arith.constant 11 : index
    %74 = memref.load %arg8[%c11] : memref<18xf32, #tpu.memory_space<smem>>
    %c12 = arith.constant 12 : index
    %75 = memref.load %arg8[%c12] : memref<18xf32, #tpu.memory_space<smem>>
    %c13 = arith.constant 13 : index
    %76 = memref.load %arg8[%c13] : memref<18xf32, #tpu.memory_space<smem>>
    %c14 = arith.constant 14 : index
    %77 = memref.load %arg8[%c14] : memref<18xf32, #tpu.memory_space<smem>>
    %c15 = arith.constant 15 : index
    %78 = memref.load %arg8[%c15] : memref<18xf32, #tpu.memory_space<smem>>
    %c16 = arith.constant 16 : index
    %79 = memref.load %arg8[%c16] : memref<18xf32, #tpu.memory_space<smem>>
    %c17 = arith.constant 17 : index
    %80 = memref.load %arg8[%c17] : memref<18xf32, #tpu.memory_space<smem>>
    %c0_21 = arith.constant 0 : index
    %81 = memref.load %arg10[%c0_21] : memref<18xf32, #tpu.memory_space<smem>>
    %c1_22 = arith.constant 1 : index
    %82 = memref.load %arg10[%c1_22] : memref<18xf32, #tpu.memory_space<smem>>
    %c2_23 = arith.constant 2 : index
    %83 = memref.load %arg10[%c2_23] : memref<18xf32, #tpu.memory_space<smem>>
    %c3_24 = arith.constant 3 : index
    %84 = memref.load %arg10[%c3_24] : memref<18xf32, #tpu.memory_space<smem>>
    %c4_25 = arith.constant 4 : index
    %85 = memref.load %arg10[%c4_25] : memref<18xf32, #tpu.memory_space<smem>>
    %c5_26 = arith.constant 5 : index
    %86 = memref.load %arg10[%c5_26] : memref<18xf32, #tpu.memory_space<smem>>
    %c6_27 = arith.constant 6 : index
    %87 = memref.load %arg10[%c6_27] : memref<18xf32, #tpu.memory_space<smem>>
    %c7_28 = arith.constant 7 : index
    %88 = memref.load %arg10[%c7_28] : memref<18xf32, #tpu.memory_space<smem>>
    %c8_29 = arith.constant 8 : index
    %89 = memref.load %arg10[%c8_29] : memref<18xf32, #tpu.memory_space<smem>>
    %c9_30 = arith.constant 9 : index
    %90 = memref.load %arg10[%c9_30] : memref<18xf32, #tpu.memory_space<smem>>
    %c10_31 = arith.constant 10 : index
    %91 = memref.load %arg10[%c10_31] : memref<18xf32, #tpu.memory_space<smem>>
    %c11_32 = arith.constant 11 : index
    %92 = memref.load %arg10[%c11_32] : memref<18xf32, #tpu.memory_space<smem>>
    %c12_33 = arith.constant 12 : index
    %93 = memref.load %arg10[%c12_33] : memref<18xf32, #tpu.memory_space<smem>>
    %c13_34 = arith.constant 13 : index
    %94 = memref.load %arg10[%c13_34] : memref<18xf32, #tpu.memory_space<smem>>
    %c14_35 = arith.constant 14 : index
    %95 = memref.load %arg10[%c14_35] : memref<18xf32, #tpu.memory_space<smem>>
    %c15_36 = arith.constant 15 : index
    %96 = memref.load %arg10[%c15_36] : memref<18xf32, #tpu.memory_space<smem>>
    %c16_37 = arith.constant 16 : index
    %97 = memref.load %arg10[%c16_37] : memref<18xf32, #tpu.memory_space<smem>>
    %c17_38 = arith.constant 17 : index
    %98 = memref.load %arg10[%c17_38] : memref<18xf32, #tpu.memory_space<smem>>
    %cst_39 = arith.constant 0.000000e+00 : f32
    %99 = vector.broadcast %cst_39 : f32 to vector<4x16xf32>
    %cst_40 = arith.constant 0.000000e+00 : f32
    %100 = vector.broadcast %cst_40 : f32 to vector<1x16xf32>
    %101 = tpu.concatenate %100, %35, %100 in 0 : vector<1x16xf32>, vector<4x16xf32>, vector<1x16xf32> -> vector<6x16xf32>
    %cst_41 = arith.constant 0.000000e+00 : f32
    %102 = vector.broadcast %cst_41 : f32 to vector<6x1xf32>
    %103 = tpu.concatenate %102, %101, %102 in 1 : vector<6x1xf32>, vector<6x16xf32>, vector<6x1xf32> -> vector<6x18xf32>
    %104 = vector.extract_strided_slice %103 {offsets = [0, 0], sizes = [4, 16], strides = [1, 1]} : vector<6x18xf32> to vector<4x16xf32>
    %105 = vector.broadcast %63 : f32 to vector<4x16xf32>
    %106 = arith.mulf %105, %104 : vector<4x16xf32>
    %107 = arith.addf %99, %106 : vector<4x16xf32>
    %108 = vector.extract_strided_slice %103 {offsets = [0, 1], sizes = [4, 16], strides = [1, 1]} : vector<6x18xf32> to vector<4x16xf32>
    %109 = vector.broadcast %64 : f32 to vector<4x16xf32>
    %110 = arith.mulf %109, %108 : vector<4x16xf32>
    %111 = arith.addf %107, %110 : vector<4x16xf32>
    %112 = vector.extract_strided_slice %103 {offsets = [0, 2], sizes = [4, 16], strides = [1, 1]} : vector<6x18xf32> to vector<4x16xf32>
    %113 = vector.broadcast %65 : f32 to vector<4x16xf32>
    %114 = arith.mulf %113, %112 : vector<4x16xf32>
    %115 = arith.addf %111, %114 : vector<4x16xf32>
    %116 = vector.extract_strided_slice %103 {offsets = [1, 0], sizes = [4, 16], strides = [1, 1]} : vector<6x18xf32> to vector<4x16xf32>
    %117 = vector.broadcast %66 : f32 to vector<4x16xf32>
    %118 = arith.mulf %117, %116 : vector<4x16xf32>
    %119 = arith.addf %115, %118 : vector<4x16xf32>
    %120 = vector.extract_strided_slice %103 {offsets = [1, 1], sizes = [4, 16], strides = [1, 1]} : vector<6x18xf32> to vector<4x16xf32>
    %121 = vector.broadcast %67 : f32 to vector<4x16xf32>
    %122 = arith.mulf %121, %120 : vector<4x16xf32>
    %123 = arith.addf %119, %122 : vector<4x16xf32>
    %124 = vector.extract_strided_slice %103 {offsets = [1, 2], sizes = [4, 16], strides = [1, 1]} : vector<6x18xf32> to vector<4x16xf32>
    %125 = vector.broadcast %68 : f32 to vector<4x16xf32>
    %126 = arith.mulf %125, %124 : vector<4x16xf32>
    %127 = arith.addf %123, %126 : vector<4x16xf32>
    %128 = vector.extract_strided_slice %103 {offsets = [2, 0], sizes = [4, 16], strides = [1, 1]} : vector<6x18xf32> to vector<4x16xf32>
    %129 = vector.broadcast %69 : f32 to vector<4x16xf32>
    %130 = arith.mulf %129, %128 : vector<4x16xf32>
    %131 = arith.addf %127, %130 : vector<4x16xf32>
    %132 = vector.extract_strided_slice %103 {offsets = [2, 1], sizes = [4, 16], strides = [1, 1]} : vector<6x18xf32> to vector<4x16xf32>
    %133 = vector.broadcast %70 : f32 to vector<4x16xf32>
    %134 = arith.mulf %133, %132 : vector<4x16xf32>
    %135 = arith.addf %131, %134 : vector<4x16xf32>
    %136 = vector.extract_strided_slice %103 {offsets = [2, 2], sizes = [4, 16], strides = [1, 1]} : vector<6x18xf32> to vector<4x16xf32>
    %137 = vector.broadcast %71 : f32 to vector<4x16xf32>
    %138 = arith.mulf %137, %136 : vector<4x16xf32>
    %139 = arith.addf %135, %138 : vector<4x16xf32>
    %cst_42 = arith.constant 0.000000e+00 : f32
    %140 = vector.broadcast %cst_42 : f32 to vector<1x16xf32>
    %141 = tpu.concatenate %140, %40, %140 in 0 : vector<1x16xf32>, vector<4x16xf32>, vector<1x16xf32> -> vector<6x16xf32>
    %cst_43 = arith.constant 0.000000e+00 : f32
    %142 = vector.broadcast %cst_43 : f32 to vector<6x1xf32>
    %143 = tpu.concatenate %142, %141, %142 in 1 : vector<6x1xf32>, vector<6x16xf32>, vector<6x1xf32> -> vector<6x18xf32>
    %144 = vector.extract_strided_slice %143 {offsets = [0, 0], sizes = [4, 16], strides = [1, 1]} : vector<6x18xf32> to vector<4x16xf32>
    %145 = vector.broadcast %72 : f32 to vector<4x16xf32>
    %146 = arith.mulf %145, %144 : vector<4x16xf32>
    %147 = arith.addf %139, %146 : vector<4x16xf32>
    %148 = vector.extract_strided_slice %143 {offsets = [0, 1], sizes = [4, 16], strides = [1, 1]} : vector<6x18xf32> to vector<4x16xf32>
    %149 = vector.broadcast %73 : f32 to vector<4x16xf32>
    %150 = arith.mulf %149, %148 : vector<4x16xf32>
    %151 = arith.addf %147, %150 : vector<4x16xf32>
    %152 = vector.extract_strided_slice %143 {offsets = [0, 2], sizes = [4, 16], strides = [1, 1]} : vector<6x18xf32> to vector<4x16xf32>
    %153 = vector.broadcast %74 : f32 to vector<4x16xf32>
    %154 = arith.mulf %153, %152 : vector<4x16xf32>
    %155 = arith.addf %151, %154 : vector<4x16xf32>
    %156 = vector.extract_strided_slice %143 {offsets = [1, 0], sizes = [4, 16], strides = [1, 1]} : vector<6x18xf32> to vector<4x16xf32>
    %157 = vector.broadcast %75 : f32 to vector<4x16xf32>
    %158 = arith.mulf %157, %156 : vector<4x16xf32>
    %159 = arith.addf %155, %158 : vector<4x16xf32>
    %160 = vector.extract_strided_slice %143 {offsets = [1, 1], sizes = [4, 16], strides = [1, 1]} : vector<6x18xf32> to vector<4x16xf32>
    %161 = vector.broadcast %76 : f32 to vector<4x16xf32>
    %162 = arith.mulf %161, %160 : vector<4x16xf32>
    %163 = arith.addf %159, %162 : vector<4x16xf32>
    %164 = vector.extract_strided_slice %143 {offsets = [1, 2], sizes = [4, 16], strides = [1, 1]} : vector<6x18xf32> to vector<4x16xf32>
    %165 = vector.broadcast %77 : f32 to vector<4x16xf32>
    %166 = arith.mulf %165, %164 : vector<4x16xf32>
    %167 = arith.addf %163, %166 : vector<4x16xf32>
    %168 = vector.extract_strided_slice %143 {offsets = [2, 0], sizes = [4, 16], strides = [1, 1]} : vector<6x18xf32> to vector<4x16xf32>
    %169 = vector.broadcast %78 : f32 to vector<4x16xf32>
    %170 = arith.mulf %169, %168 : vector<4x16xf32>
    %171 = arith.addf %167, %170 : vector<4x16xf32>
    %172 = vector.extract_strided_slice %143 {offsets = [2, 1], sizes = [4, 16], strides = [1, 1]} : vector<6x18xf32> to vector<4x16xf32>
    %173 = vector.broadcast %79 : f32 to vector<4x16xf32>
    %174 = arith.mulf %173, %172 : vector<4x16xf32>
    %175 = arith.addf %171, %174 : vector<4x16xf32>
    %176 = vector.extract_strided_slice %143 {offsets = [2, 2], sizes = [4, 16], strides = [1, 1]} : vector<6x18xf32> to vector<4x16xf32>
    %177 = vector.broadcast %80 : f32 to vector<4x16xf32>
    %178 = arith.mulf %177, %176 : vector<4x16xf32>
    %179 = arith.addf %175, %178 : vector<4x16xf32>
    %c0_44 = arith.constant 0 : index
    %180 = memref.load %arg9[%c0_44] : memref<2xf32, #tpu.memory_space<smem>>
    %181 = vector.broadcast %180 : f32 to vector<4x16xf32>
    %182 = arith.mulf %179, %181 : vector<4x16xf32>
    %c1_45 = arith.constant 1 : index
    %183 = memref.load %arg9[%c1_45] : memref<2xf32, #tpu.memory_space<smem>>
    %184 = vector.broadcast %183 : f32 to vector<4x16xf32>
    %185 = arith.addf %182, %184 : vector<4x16xf32>
    %186 = arith.negf %185 : vector<4x16xf32>
    %187 = math.exp %186 : vector<4x16xf32>
    %cst_46 = arith.constant 1.000000e+00 : f32
    %188 = vector.broadcast %cst_46 : f32 to vector<4x16xf32>
    %189 = arith.addf %188, %187 : vector<4x16xf32>
    %190 = arith.divf %188, %189 : vector<4x16xf32>
    %cst_47 = arith.constant 0.000000e+00 : f32
    %191 = vector.broadcast %cst_47 : f32 to vector<4x16xf32>
    %cst_48 = arith.constant 0.000000e+00 : f32
    %192 = vector.broadcast %cst_48 : f32 to vector<1x16xf32>
    %193 = tpu.concatenate %192, %62, %192 in 0 : vector<1x16xf32>, vector<4x16xf32>, vector<1x16xf32> -> vector<6x16xf32>
    %cst_49 = arith.constant 0.000000e+00 : f32
    %194 = vector.broadcast %cst_49 : f32 to vector<6x1xf32>
    %195 = tpu.concatenate %194, %193, %194 in 1 : vector<6x1xf32>, vector<6x16xf32>, vector<6x1xf32> -> vector<6x18xf32>
    %196 = vector.extract_strided_slice %195 {offsets = [0, 0], sizes = [4, 16], strides = [1, 1]} : vector<6x18xf32> to vector<4x16xf32>
    %197 = vector.broadcast %81 : f32 to vector<4x16xf32>
    %198 = arith.mulf %197, %196 : vector<4x16xf32>
    %199 = arith.addf %191, %198 : vector<4x16xf32>
    %200 = vector.extract_strided_slice %195 {offsets = [0, 1], sizes = [4, 16], strides = [1, 1]} : vector<6x18xf32> to vector<4x16xf32>
    %201 = vector.broadcast %84 : f32 to vector<4x16xf32>
    %202 = arith.mulf %201, %200 : vector<4x16xf32>
    %203 = arith.addf %199, %202 : vector<4x16xf32>
    %204 = vector.extract_strided_slice %195 {offsets = [0, 2], sizes = [4, 16], strides = [1, 1]} : vector<6x18xf32> to vector<4x16xf32>
    %205 = vector.broadcast %87 : f32 to vector<4x16xf32>
    %206 = arith.mulf %205, %204 : vector<4x16xf32>
    %207 = arith.addf %203, %206 : vector<4x16xf32>
    %208 = vector.extract_strided_slice %195 {offsets = [1, 0], sizes = [4, 16], strides = [1, 1]} : vector<6x18xf32> to vector<4x16xf32>
    %209 = vector.broadcast %82 : f32 to vector<4x16xf32>
    %210 = arith.mulf %209, %208 : vector<4x16xf32>
    %211 = arith.addf %207, %210 : vector<4x16xf32>
    %212 = vector.extract_strided_slice %195 {offsets = [1, 1], sizes = [4, 16], strides = [1, 1]} : vector<6x18xf32> to vector<4x16xf32>
    %213 = vector.broadcast %85 : f32 to vector<4x16xf32>
    %214 = arith.mulf %213, %212 : vector<4x16xf32>
    %215 = arith.addf %211, %214 : vector<4x16xf32>
    %216 = vector.extract_strided_slice %195 {offsets = [1, 2], sizes = [4, 16], strides = [1, 1]} : vector<6x18xf32> to vector<4x16xf32>
    %217 = vector.broadcast %88 : f32 to vector<4x16xf32>
    %218 = arith.mulf %217, %216 : vector<4x16xf32>
    %219 = arith.addf %215, %218 : vector<4x16xf32>
    %220 = vector.extract_strided_slice %195 {offsets = [2, 0], sizes = [4, 16], strides = [1, 1]} : vector<6x18xf32> to vector<4x16xf32>
    %221 = vector.broadcast %83 : f32 to vector<4x16xf32>
    %222 = arith.mulf %221, %220 : vector<4x16xf32>
    %223 = arith.addf %219, %222 : vector<4x16xf32>
    %224 = vector.extract_strided_slice %195 {offsets = [2, 1], sizes = [4, 16], strides = [1, 1]} : vector<6x18xf32> to vector<4x16xf32>
    %225 = vector.broadcast %86 : f32 to vector<4x16xf32>
    %226 = arith.mulf %225, %224 : vector<4x16xf32>
    %227 = arith.addf %223, %226 : vector<4x16xf32>
    %228 = vector.extract_strided_slice %195 {offsets = [2, 2], sizes = [4, 16], strides = [1, 1]} : vector<6x18xf32> to vector<4x16xf32>
    %229 = vector.broadcast %89 : f32 to vector<4x16xf32>
    %230 = arith.mulf %229, %228 : vector<4x16xf32>
    %231 = arith.addf %227, %230 : vector<4x16xf32>
    %cst_50 = arith.constant 0.000000e+00 : f32
    %232 = vector.broadcast %cst_50 : f32 to vector<1x16xf32>
    %233 = tpu.concatenate %232, %44, %232 in 0 : vector<1x16xf32>, vector<4x16xf32>, vector<1x16xf32> -> vector<6x16xf32>
    %cst_51 = arith.constant 0.000000e+00 : f32
    %234 = vector.broadcast %cst_51 : f32 to vector<6x1xf32>
    %235 = tpu.concatenate %234, %233, %234 in 1 : vector<6x1xf32>, vector<6x16xf32>, vector<6x1xf32> -> vector<6x18xf32>
    %236 = vector.extract_strided_slice %235 {offsets = [0, 0], sizes = [4, 16], strides = [1, 1]} : vector<6x18xf32> to vector<4x16xf32>
    %237 = vector.broadcast %90 : f32 to vector<4x16xf32>
    %238 = arith.mulf %237, %236 : vector<4x16xf32>
    %239 = arith.addf %231, %238 : vector<4x16xf32>
    %240 = vector.extract_strided_slice %235 {offsets = [0, 1], sizes = [4, 16], strides = [1, 1]} : vector<6x18xf32> to vector<4x16xf32>
    %241 = vector.broadcast %93 : f32 to vector<4x16xf32>
    %242 = arith.mulf %241, %240 : vector<4x16xf32>
    %243 = arith.addf %239, %242 : vector<4x16xf32>
    %244 = vector.extract_strided_slice %235 {offsets = [0, 2], sizes = [4, 16], strides = [1, 1]} : vector<6x18xf32> to vector<4x16xf32>
    %245 = vector.broadcast %96 : f32 to vector<4x16xf32>
    %246 = arith.mulf %245, %244 : vector<4x16xf32>
    %247 = arith.addf %243, %246 : vector<4x16xf32>
    %248 = vector.extract_strided_slice %235 {offsets = [1, 0], sizes = [4, 16], strides = [1, 1]} : vector<6x18xf32> to vector<4x16xf32>
    %249 = vector.broadcast %91 : f32 to vector<4x16xf32>
    %250 = arith.mulf %249, %248 : vector<4x16xf32>
    %251 = arith.addf %247, %250 : vector<4x16xf32>
    %252 = vector.extract_strided_slice %235 {offsets = [1, 1], sizes = [4, 16], strides = [1, 1]} : vector<6x18xf32> to vector<4x16xf32>
    %253 = vector.broadcast %94 : f32 to vector<4x16xf32>
    %254 = arith.mulf %253, %252 : vector<4x16xf32>
    %255 = arith.addf %251, %254 : vector<4x16xf32>
    %256 = vector.extract_strided_slice %235 {offsets = [1, 2], sizes = [4, 16], strides = [1, 1]} : vector<6x18xf32> to vector<4x16xf32>
    %257 = vector.broadcast %97 : f32 to vector<4x16xf32>
    %258 = arith.mulf %257, %256 : vector<4x16xf32>
    %259 = arith.addf %255, %258 : vector<4x16xf32>
    %260 = vector.extract_strided_slice %235 {offsets = [2, 0], sizes = [4, 16], strides = [1, 1]} : vector<6x18xf32> to vector<4x16xf32>
    %261 = vector.broadcast %92 : f32 to vector<4x16xf32>
    %262 = arith.mulf %261, %260 : vector<4x16xf32>
    %263 = arith.addf %259, %262 : vector<4x16xf32>
    %264 = vector.extract_strided_slice %235 {offsets = [2, 1], sizes = [4, 16], strides = [1, 1]} : vector<6x18xf32> to vector<4x16xf32>
    %265 = vector.broadcast %95 : f32 to vector<4x16xf32>
    %266 = arith.mulf %265, %264 : vector<4x16xf32>
    %267 = arith.addf %263, %266 : vector<4x16xf32>
    %268 = vector.extract_strided_slice %235 {offsets = [2, 2], sizes = [4, 16], strides = [1, 1]} : vector<6x18xf32> to vector<4x16xf32>
    %269 = vector.broadcast %98 : f32 to vector<4x16xf32>
    %270 = arith.mulf %269, %268 : vector<4x16xf32>
    %271 = arith.addf %267, %270 : vector<4x16xf32>
    %c0_52 = arith.constant 0 : index
    %272 = memref.load %arg11[%c0_52] : memref<2xf32, #tpu.memory_space<smem>>
    %273 = vector.broadcast %272 : f32 to vector<4x16xf32>
    %274 = arith.mulf %271, %273 : vector<4x16xf32>
    %c1_53 = arith.constant 1 : index
    %275 = memref.load %arg11[%c1_53] : memref<2xf32, #tpu.memory_space<smem>>
    %276 = vector.broadcast %275 : f32 to vector<4x16xf32>
    %277 = arith.addf %274, %276 : vector<4x16xf32>
    %278 = arith.negf %277 : vector<4x16xf32>
    %279 = math.exp %278 : vector<4x16xf32>
    %cst_54 = arith.constant 1.000000e+00 : f32
    %280 = vector.broadcast %cst_54 : f32 to vector<4x16xf32>
    %281 = arith.addf %280, %279 : vector<4x16xf32>
    %282 = arith.divf %280, %281 : vector<4x16xf32>
    %c0_55 = arith.constant 0 : index
    %c0_56 = arith.constant 0 : index
    %283 = vector.load %arg6[%c0_55, %c0_56] : memref<16x256xf32, #tpu.memory_space<vmem>>, vector<16x256xf32>
    %cst_57 = arith.constant dense<0.000000e+00> : vector<4x256xf32>
    %284 = tpu.matmul %190, %283, %cst_57 {dimension_numbers = #tpu.dot_dimension_numbers<[1], [0], [0], [1], [0, 0, 1, 1], [], []>} : vector<4x16xf32>, vector<16x256xf32>, vector<4x256xf32> -> vector<4x256xf32>
    %c0_58 = arith.constant 0 : index
    %c0_59 = arith.constant 0 : index
    %285 = vector.load %arg7[%c0_58, %c0_59] : memref<16x256xf32, #tpu.memory_space<vmem>>, vector<16x256xf32>
    %cst_60 = arith.constant dense<0.000000e+00> : vector<4x256xf32>
    %286 = tpu.matmul %282, %285, %cst_60 {dimension_numbers = #tpu.dot_dimension_numbers<[1], [0], [0], [1], [0, 0, 1, 1], [], []>} : vector<4x16xf32>, vector<16x256xf32>, vector<4x256xf32> -> vector<4x256xf32>
    %287 = arith.addf %284, %286 : vector<4x256xf32>
    %cst_61 = arith.constant 5.000000e-01 : f32
    %288 = vector.broadcast %cst_61 : f32 to vector<4x256xf32>
    %289 = arith.mulf %288, %14 : vector<4x256xf32>
    %290 = arith.mulf %289, %287 : vector<4x256xf32>
    %c0_62 = arith.constant 0 : index
    %c0_63 = arith.constant 0 : index
    %c0_64 = arith.constant 0 : index
    %291 = vector.load %arg12[%c0_62, %c0_63, %c0_64] : memref<1x4x256xf32, #tpu.memory_space<vmem>>, vector<1x4x256xf32>
    %292 = vector.shape_cast %291 : vector<1x4x256xf32> to vector<4x256xf32>
    %293 = vector.shape_cast %290 : vector<4x256xf32> to vector<1x4x256xf32>
    tpu.vector_store %arg12[%c0_62, %c0_63, %c0_64], %293 {strides = array<i32>} : memref<1x4x256xf32, #tpu.memory_space<vmem>>, vector<1x4x256xf32>,
    return
  }
  func.func @transform_0(%arg0: i32) -> (i32, i32, i32) {
    %c0_i32 = arith.constant 0 : i32
    %c0_i32_0 = arith.constant 0 : i32
    %c0_i32_1 = arith.constant 0 : i32
    return %arg0, %c0_i32, %c0_i32_0 : i32, i32, i32
  }
  func.func @transform_1(%arg0: i32) -> (i32, i32) {
    %c0_i32 = arith.constant 0 : i32
    %c0_i32_0 = arith.constant 0 : i32
    %c0_i32_1 = arith.constant 0 : i32
    return %c0_i32, %c0_i32_0 : i32, i32
  }
  func.func @transform_2(%arg0: i32) -> (i32, i32) {
    %c0_i32 = arith.constant 0 : i32
    %c0_i32_0 = arith.constant 0 : i32
    %c0_i32_1 = arith.constant 0 : i32
    return %c0_i32, %c0_i32_0 : i32, i32
  }
  func.func @transform_3(%arg0: i32) -> (i32, i32) {
    %c0_i32 = arith.constant 0 : i32
    %c0_i32_0 = arith.constant 0 : i32
    %c0_i32_1 = arith.constant 0 : i32
    return %c0_i32, %c0_i32_0 : i32, i32
  }
  func.func @transform_4(%arg0: i32) -> (i32, i32) {
    %c0_i32 = arith.constant 0 : i32
    %c0_i32_0 = arith.constant 0 : i32
    %c0_i32_1 = arith.constant 0 : i32
    return %c0_i32, %c0_i32_0 : i32, i32
  }
  func.func @transform_5(%arg0: i32) -> (i32, i32) {
    %c0_i32 = arith.constant 0 : i32
    %c0_i32_0 = arith.constant 0 : i32
    %c0_i32_1 = arith.constant 0 : i32
    return %c0_i32, %c0_i32_0 : i32, i32
  }
  func.func @transform_6(%arg0: i32) -> (i32, i32) {
    %c0_i32 = arith.constant 0 : i32
    %c0_i32_0 = arith.constant 0 : i32
    %c0_i32_1 = arith.constant 0 : i32
    return %c0_i32, %c0_i32_0 : i32, i32
  }
  func.func @transform_7(%arg0: i32) -> i32 {
    %c0_i32 = arith.constant 0 : i32
    %c0_i32_0 = arith.constant 0 : i32
    return %c0_i32 : i32
  }
  func.func @transform_8(%arg0: i32) -> i32 {
    %c0_i32 = arith.constant 0 : i32
    %c0_i32_0 = arith.constant 0 : i32
    return %c0_i32 : i32
  }
  func.func @transform_9(%arg0: i32) -> i32 {
    %c0_i32 = arith.constant 0 : i32
    %c0_i32_0 = arith.constant 0 : i32
    return %c0_i32 : i32
  }
  func.func @transform_10(%arg0: i32) -> i32 {
    %c0_i32 = arith.constant 0 : i32
    %c0_i32_0 = arith.constant 0 : i32
    return %c0_i32 : i32
  }
  func.func @transform_11(%arg0: i32) -> (i32, i32, i32) {
    %c0_i32 = arith.constant 0 : i32
    %c0_i32_0 = arith.constant 0 : i32
    %c0_i32_1 = arith.constant 0 : i32
    return %arg0, %c0_i32, %c0_i32_0 : i32, i32, i32
  }
}

</mosaic_0001>

<llo_original>
// kernel: tpu_custom_call.1
$region0: #{tpu_custom_call.1}
  #allocation0 [shape = 'u32[]', space=smem, size = 0x4, offset = 0x4, fixed_abs, tag = 'smem constant byte address 0x4 - core index']
  #allocation1 [shape = 'u32[144,128]{1,0:T(1,128)}', space=vmem, size = 0x12000, scoped, tag = 'internal scratch']
  %s0 = inlined_call_operand.vmem [shape: f32[2,4,256], index: 0, kind: input, shape index: {}]
  %s1 = inlined_call_operand.vmem [shape: f32[4,4], index: 1, kind: input, shape index: {}]
  %s2 = inlined_call_operand.vmem [shape: f32[4,1], index: 2, kind: input, shape index: {}]
  %s3 = inlined_call_operand.vmem [shape: f32[256,16], index: 3, kind: input, shape index: {}]
  %s4 = inlined_call_operand.vmem [shape: f32[256,16], index: 4, kind: input, shape index: {}]
  %s5 = inlined_call_operand.vmem [shape: f32[16,256], index: 5, kind: input, shape index: {}]
  %s6 = inlined_call_operand.vmem [shape: f32[16,256], index: 6, kind: input, shape index: {}]
  %s7 = inlined_call_operand.vmem [shape: f32[18], index: 7, kind: input, shape index: {}]
  %s8 = inlined_call_operand.vmem [shape: f32[2], index: 8, kind: input, shape index: {}]
  %s9 = inlined_call_operand.vmem [shape: f32[18], index: 9, kind: input, shape index: {}]
  %s10 = inlined_call_operand.vmem [shape: f32[2], index: 10, kind: input, shape index: {}]
  %s11 = inlined_call_operand.hbm [shape: f32[2,4,256], index: 11, kind: output, shape index: {}]
  %s12 = sld [smem:[#allocation0]]
  $region93: #{tpu_custom_call.1} parent=0
    _
  %s14 = ssub.s32 1, %s12
  %s15 = scalar_select 0, %s14, %s12
  $region1: #{tpu_custom_call.1} parent=0
    #allocation2 [shape = 'u8[512]{0}', space=smem, size = 0x200, scoped, tag = 'input window, operand 7, single buffered']
    #allocation3 [shape = 's32[2]{0}', space=sflag, size = 0x8, scoped, tag = 'scoped memory for tpu_custom_call.1']
    #allocation4 [shape = 's32[2]{0}', space=sflag, size = 0x8, scoped, tag = 'scoped memory for tpu_custom_call.1']
    #allocation5 [shape = 'u8[512]{0}', space=smem, size = 0x200, scoped, tag = 'input window, operand 8, single buffered']
    #allocation6 [shape = 's32[1]{0}', space=sflag, size = 0x4, scoped, tag = 'scoped memory for tpu_custom_call.1']
    #allocation7 [shape = 'u8[512]{0}', space=smem, size = 0x200, scoped, tag = 'input window, operand 9, single buffered']
    #allocation8 [shape = 'u8[512]{0}', space=smem, size = 0x200, scoped, tag = 'input window, operand 10, single buffered']
    #allocation9 [shape = 's32[1]{0}', space=sflag, size = 0x4, scoped, tag = 'scoped memory for tpu_custom_call.1']
    #allocation10 [shape = 'u8[8192]{0}', space=vmem, size = 0x2000, scoped, tag = 'output window, operand 0']
    %16 = vsyncpa [#allocation4], 0
    %17 = vsyncpa [#allocation6], 0
    %18 = vsyncpa [#allocation9], 0
    %19 = vsyncpa [#allocation3], 0
    %s20 = scalar_lea.sflag [#allocation3], 1
    %21 = vsyncpa %s20, 0
    loop: start=0, step=1, limit=4
    $region2: #{tpu_custom_call.1} parent=1 // loop_pre_header
      _
    $region3: #{tpu_custom_call.1} parent=1 // loop_header
      %s23 = sphi 0, %s27
      %p24 = scmp.ge.s32.totalorder %s23, 4
      %s33 = sphi 0, %s35
      %s36 = sphi 0, %s33
      %s37 = sphi 0, %s36
      %s53 = sphi 0, %s37
      %s57 = sphi 0, %s57
      %s59 = sphi 0, %s57
      %s60 = sphi 0, %s59
      %s74 = sphi 0, %s60
      %s78 = sphi 0, %s78
      %s80 = sphi 0, %s78
      %s81 = sphi 0, %s80
      %s95 = sphi 0, %s81
      %s99 = sphi 0, %s99
      %s101 = sphi 0, %s99
      %s102 = sphi 0, %s101
      %s116 = sphi 0, %s102
      %s120 = sphi 0, %s120
      %s122 = sphi 0, %s120
      %s123 = sphi 0, %s122
      %s137 = sphi 0, %s123
      %s141 = sphi 0, %s141
      %s143 = sphi 0, %s141
      %s144 = sphi 0, %s143
      %s158 = sphi 0, %s144
      %s162 = sphi 0, %s162
      %s164 = sphi 0, %s162
      %s165 = sphi 0, %s164
      %s179 = sphi 0, %s165
      %s183 = sphi 0, %s183
      %s185 = sphi 0, %s183
      %s186 = sphi 0, %s185
      %s200 = sphi 0, %s186
      %s204 = sphi 0, %s204
      %s206 = sphi 0, %s204
      %s207 = sphi 0, %s206
      %s221 = sphi 0, %s207
      %s225 = sphi 0, %s225
      %s227 = sphi 0, %s225
      %s228 = sphi 0, %s227
      %s242 = sphi 0, %s228
      %s246 = sphi 0, %s246
      %s248 = sphi 0, %s246
      %s249 = sphi 0, %s248
      %s263 = sphi 0, %s249
      %s269 = sphi 0, %s271
      %s272 = sphi 0, %s269
      %s273 = sphi 0, %s272
      %s289 = sphi 0, %s273
    $region4: #{tpu_custom_call.1} parent=1 // loop_header_branch
      %26 = sbr.rel (%p24) target = $region8
    $region5: #{tpu_custom_call.1} parent=1 // loop_body
      %s28 = ssub.s32 %s23, 1
      %s29 = ssub.s32 %s23, 2
      %s30 = sadd.s32 %s23, 1
      %s31 = ssub.s32 %s23, %s30
      %p32 = scmp.eq.s32.totalorder %s31, 0
      %s34 = sadd.s32 %s33, 1
      %s35 = scalar_select %p32, %s33, %s34
      %p38 = pneg %p32
      %p39 = scmp.eq.s32.totalorder %s23, 1
      %p40 = por %p38, %p39
      %p41 = scmp.ne.s32.totalorder %s33, %s36
      %p42 = scmp.eq.s32.totalorder %s23, 0
      %p43 = por %p41, %p42
      %p44 = scmp.ne.s32.totalorder %s33, %s36
      %p45 = scmp.eq.s32.totalorder %s28, 1
      %p46 = por %p44, %p45
      %p47 = scmp.ne.s32.totalorder %s36, %s37
      %p48 = scmp.eq.s32.totalorder %s28, 0
      %p49 = por %p47, %p48
      %p50 = scmp.ne.s32.totalorder %s36, %s37
      %p51 = scmp.eq.s32.totalorder %s29, 1
      %p52 = por %p50, %p51
      %p54 = scmp.ne.s32.totalorder %s37, %s53
      %p55 = scmp.eq.s32.totalorder %s29, 0
      %p56 = por %p54, %p55
      %s58 = sadd.s32 %s57, 1
      %p61 = scmp.eq.s32.totalorder %s23, 1
      %p62 = scmp.ne.s32.totalorder %s57, %s59
      %p63 = scmp.eq.s32.totalorder %s23, 0
      %p64 = por %p62, %p63
      %p65 = scmp.ne.s32.totalorder %s57, %s59
      %p66 = scmp.eq.s32.totalorder %s28, 1
      %p67 = por %p65, %p66
      %p68 = scmp.ne.s32.totalorder %s59, %s60
      %p69 = scmp.eq.s32.totalorder %s28, 0
      %p70 = por %p68, %p69
      %p71 = scmp.ne.s32.totalorder %s59, %s60
      %p72 = scmp.eq.s32.totalorder %s29, 1
      %p73 = por %p71, %p72
      %p75 = scmp.ne.s32.totalorder %s60, %s74
      %p76 = scmp.eq.s32.totalorder %s29, 0
      %p77 = por %p75, %p76
      %s79 = sadd.s32 %s78, 1
      %p82 = scmp.eq.s32.totalorder %s23, 1
      %p83 = scmp.ne.s32.totalorder %s78, %s80
      %p84 = scmp.eq.s32.totalorder %s23, 0
      %p85 = por %p83, %p84
      %p86 = scmp.ne.s32.totalorder %s78, %s80
      %p87 = scmp.eq.s32.totalorder %s28, 1
      %p88 = por %p86, %p87
      %p89 = scmp.ne.s32.totalorder %s80, %s81
      %p90 = scmp.eq.s32.totalorder %s28, 0
      %p91 = por %p89, %p90
      %p92 = scmp.ne.s32.totalorder %s80, %s81
      %p93 = scmp.eq.s32.totalorder %s29, 1
      %p94 = por %p92, %p93
      %p96 = scmp.ne.s32.totalorder %s81, %s95
      %p97 = scmp.eq.s32.totalorder %s29, 0
      %p98 = por %p96, %p97
      %s100 = sadd.s32 %s99, 1
      %p103 = scmp.eq.s32.totalorder %s23, 1
      %p104 = scmp.ne.s32.totalorder %s99, %s101
      %p105 = scmp.eq.s32.totalorder %s23, 0
      %p106 = por %p104, %p105
      %p107 = scmp.ne.s32.totalorder %s99, %s101
      %p108 = scmp.eq.s32.totalorder %s28, 1
      %p109 = por %p107, %p108
      %p110 = scmp.ne.s32.totalorder %s101, %s102
      %p111 = scmp.eq.s32.totalorder %s28, 0
      %p112 = por %p110, %p111
      %p113 = scmp.ne.s32.totalorder %s101, %s102
      %p114 = scmp.eq.s32.totalorder %s29, 1
      %p115 = por %p113, %p114
      %p117 = scmp.ne.s32.totalorder %s102, %s116
      %p118 = scmp.eq.s32.totalorder %s29, 0
      %p119 = por %p117, %p118
      %s121 = sadd.s32 %s120, 1
      %p124 = scmp.eq.s32.totalorder %s23, 1
      %p125 = scmp.ne.s32.totalorder %s120, %s122
      %p126 = scmp.eq.s32.totalorder %s23, 0
      %p127 = por %p125, %p126
      %p128 = scmp.ne.s32.totalorder %s120, %s122
      %p129 = scmp.eq.s32.totalorder %s28, 1
      %p130 = por %p128, %p129
      %p131 = scmp.ne.s32.totalorder %s122, %s123
      %p132 = scmp.eq.s32.totalorder %s28, 0
      %p133 = por %p131, %p132
      %p134 = scmp.ne.s32.totalorder %s122, %s123
      %p135 = scmp.eq.s32.totalorder %s29, 1
      %p136 = por %p134, %p135
      %p138 = scmp.ne.s32.totalorder %s123, %s137
      %p139 = scmp.eq.s32.totalorder %s29, 0
      %p140 = por %p138, %p139
      %s142 = sadd.s32 %s141, 1
      %p145 = scmp.eq.s32.totalorder %s23, 1
      %p146 = scmp.ne.s32.totalorder %s141, %s143
      %p147 = scmp.eq.s32.totalorder %s23, 0
      %p148 = por %p146, %p147
      %p149 = scmp.ne.s32.totalorder %s141, %s143
      %p150 = scmp.eq.s32.totalorder %s28, 1
      %p151 = por %p149, %p150
      %p152 = scmp.ne.s32.totalorder %s143, %s144
      %p153 = scmp.eq.s32.totalorder %s28, 0
      %p154 = por %p152, %p153
      %p155 = scmp.ne.s32.totalorder %s143, %s144
      %p156 = scmp.eq.s32.totalorder %s29, 1
      %p157 = por %p155, %p156
      %p159 = scmp.ne.s32.totalorder %s144, %s158
      %p160 = scmp.eq.s32.totalorder %s29, 0
      %p161 = por %p159, %p160
      %s163 = sadd.s32 %s162, 1
      %p166 = scmp.eq.s32.totalorder %s23, 1
      %p167 = scmp.ne.s32.totalorder %s162, %s164
      %p168 = scmp.eq.s32.totalorder %s23, 0
      %p169 = por %p167, %p168
      %p170 = scmp.ne.s32.totalorder %s162, %s164
      %p171 = scmp.eq.s32.totalorder %s28, 1
      %p172 = por %p170, %p171
      %p173 = scmp.ne.s32.totalorder %s164, %s165
      %p174 = scmp.eq.s32.totalorder %s28, 0
      %p175 = por %p173, %p174
      %p176 = scmp.ne.s32.totalorder %s164, %s165
      %p177 = scmp.eq.s32.totalorder %s29, 1
      %p178 = por %p176, %p177
      %p180 = scmp.ne.s32.totalorder %s165, %s179
      %p181 = scmp.eq.s32.totalorder %s29, 0
      %p182 = por %p180, %p181
      %s184 = sadd.s32 %s183, 1
      %p187 = scmp.eq.s32.totalorder %s23, 1
      %p188 = scmp.ne.s32.totalorder %s183, %s185
      %p189 = scmp.eq.s32.totalorder %s23, 0
      %p190 = por %p188, %p189
      %p191 = scmp.ne.s32.totalorder %s183, %s185
      %p192 = scmp.eq.s32.totalorder %s28, 1
      %p193 = por %p191, %p192
      %p194 = scmp.ne.s32.totalorder %s185, %s186
      %p195 = scmp.eq.s32.totalorder %s28, 0
      %p196 = por %p194, %p195
      %p197 = scmp.ne.s32.totalorder %s185, %s186
      %p198 = scmp.eq.s32.totalorder %s29, 1
      %p199 = por %p197, %p198
      %p201 = scmp.ne.s32.totalorder %s186, %s200
      %p202 = scmp.eq.s32.totalorder %s29, 0
      %p203 = por %p201, %p202
      %s205 = sadd.s32 %s204, 1
      %p208 = scmp.eq.s32.totalorder %s23, 1
      %p209 = scmp.ne.s32.totalorder %s204, %s206
      %p210 = scmp.eq.s32.totalorder %s23, 0
      %p211 = por %p209, %p210
      %p212 = scmp.ne.s32.totalorder %s204, %s206
      %p213 = scmp.eq.s32.totalorder %s28, 1
      %p214 = por %p212, %p213
      %p215 = scmp.ne.s32.totalorder %s206, %s207
      %p216 = scmp.eq.s32.totalorder %s28, 0
      %p217 = por %p215, %p216
      %p218 = scmp.ne.s32.totalorder %s206, %s207
      %p219 = scmp.eq.s32.totalorder %s29, 1
      %p220 = por %p218, %p219
      %p222 = scmp.ne.s32.totalorder %s207, %s221
      %p223 = scmp.eq.s32.totalorder %s29, 0
      %p224 = por %p222, %p223
      %s226 = sadd.s32 %s225, 1
      %p229 = scmp.eq.s32.totalorder %s23, 1
      %p230 = scmp.ne.s32.totalorder %s225, %s227
      %p231 = scmp.eq.s32.totalorder %s23, 0
      %p232 = por %p230, %p231
      %p233 = scmp.ne.s32.totalorder %s225, %s227
      %p234 = scmp.eq.s32.totalorder %s28, 1
      %p235 = por %p233, %p234
      %p236 = scmp.ne.s32.totalorder %s227, %s228
      %p237 = scmp.eq.s32.totalorder %s28, 0
      %p238 = por %p236, %p237
      %p239 = scmp.ne.s32.totalorder %s227, %s228
      %p240 = scmp.eq.s32.totalorder %s29, 1
      %p241 = por %p239, %p240
      %p243 = scmp.ne.s32.totalorder %s228, %s242
      %p244 = scmp.eq.s32.totalorder %s29, 0
      %p245 = por %p243, %p244
      %s247 = sadd.s32 %s246, 1
      %p250 = scmp.eq.s32.totalorder %s23, 1
      %p251 = scmp.ne.s32.totalorder %s246, %s248
      %p252 = scmp.eq.s32.totalorder %s23, 0
      %p253 = por %p251, %p252
      %p254 = scmp.ne.s32.totalorder %s246, %s248
      %p255 = scmp.eq.s32.totalorder %s28, 1
      %p256 = por %p254, %p255
      %p257 = scmp.ne.s32.totalorder %s248, %s249
      %p258 = scmp.eq.s32.totalorder %s28, 0
      %p259 = por %p257, %p258
      %p260 = scmp.ne.s32.totalorder %s248, %s249
      %p261 = scmp.eq.s32.totalorder %s29, 1
      %p262 = por %p260, %p261
      %p264 = scmp.ne.s32.totalorder %s249, %s263
      %p265 = scmp.eq.s32.totalorder %s29, 0
      %p266 = por %p264, %p265
      %s267 = ssub.s32 %s23, %s30
      %p268 = scmp.eq.s32.totalorder %s267, 0
      %s270 = sadd.s32 %s269, 1
      %s271 = scalar_select %p268, %s269, %s270
      %p274 = pneg %p268
      %p275 = scmp.eq.s32.totalorder %s23, 1
      %p276 = por %p274, %p275
      %p277 = scmp.ne.s32.totalorder %s269, %s272
      %p278 = scmp.eq.s32.totalorder %s23, 0
      %p279 = por %p277, %p278
      %p280 = scmp.ne.s32.totalorder %s269, %s272
      %p281 = scmp.eq.s32.totalorder %s28, 1
      %p282 = por %p280, %p281
      %p283 = scmp.ne.s32.totalorder %s272, %s273
      %p284 = scmp.eq.s32.totalorder %s28, 0
      %p285 = por %p283, %p284
      %p286 = scmp.ne.s32.totalorder %s272, %s273
      %p287 = scmp.eq.s32.totalorder %s29, 1
      %p288 = por %p286, %p287
      %p290 = scmp.ne.s32.totalorder %s273, %s289
      %p291 = scmp.eq.s32.totalorder %s29, 0
      %p292 = por %p290, %p291
      %p293 = scmp.le.s32.totalorder 1, %s23
      %p294 = scmp.lt.s32.totalorder %s23, 3
      %p295 = pnand %p293, %p294
      %p296 = pneg %p295
      // Predicated region
      $region9: #{tpu_custom_call.1} parent=5 // pred_check
        _
      $region10: #{tpu_custom_call.1} parent=5 // pred_check_branch
        %298 = sbr.rel (%p295) target = $region12
      $region11: #{tpu_custom_call.1} parent=5 // pred_region
        %s299 = ssub.s32 %s23, 1
        // Predicated region
        $region13: #{tpu_custom_call.1} parent=11 // pred_check
          %p300 = pneg %p70
        $region14: #{tpu_custom_call.1} parent=11 // pred_check_branch
          %302 = sbr.rel (%p300) target = $region16
        $region15: #{tpu_custom_call.1} parent=11 // pred_region
          _
        $region16: #{tpu_custom_call.1} parent=11 // pred_fallthru
          _
        // Predicated region
        $region17: #{tpu_custom_call.1} parent=11 // pred_check
          %p303 = pneg %p91
        $region18: #{tpu_custom_call.1} parent=11 // pred_check_branch
          %305 = sbr.rel (%p303) target = $region20
        $region19: #{tpu_custom_call.1} parent=11 // pred_region
          _
        $region20: #{tpu_custom_call.1} parent=11 // pred_fallthru
          _
        // Predicated region
        $region21: #{tpu_custom_call.1} parent=11 // pred_check
          %p306 = pneg %p112
        $region22: #{tpu_custom_call.1} parent=11 // pred_check_branch
          %308 = sbr.rel (%p306) target = $region24
        $region23: #{tpu_custom_call.1} parent=11 // pred_region
          _
        $region24: #{tpu_custom_call.1} parent=11 // pred_fallthru
          _
        // Predicated region
        $region25: #{tpu_custom_call.1} parent=11 // pred_check
          %p309 = pneg %p133
        $region26: #{tpu_custom_call.1} parent=11 // pred_check_branch
          %311 = sbr.rel (%p309) target = $region28
        $region27: #{tpu_custom_call.1} parent=11 // pred_region
          _
        $region28: #{tpu_custom_call.1} parent=11 // pred_fallthru
          _
        // Predicated region
        $region29: #{tpu_custom_call.1} parent=11 // pred_check
          %p312 = pneg %p154
        $region30: #{tpu_custom_call.1} parent=11 // pred_check_branch
          %314 = sbr.rel (%p312) target = $region32
        $region31: #{tpu_custom_call.1} parent=11 // pred_region
          _
        $region32: #{tpu_custom_call.1} parent=11 // pred_fallthru
          _
        // Predicated region
        $region33: #{tpu_custom_call.1} parent=11 // pred_check
          %p315 = pneg %p175
        $region34: #{tpu_custom_call.1} parent=11 // pred_check_branch
          %317 = sbr.rel (%p315) target = $region36
        $region35: #{tpu_custom_call.1} parent=11 // pred_region
          _
        $region36: #{tpu_custom_call.1} parent=11 // pred_fallthru
          _
        // Predicated region
        $region37: #{tpu_custom_call.1} parent=11 // pred_check
          %p318 = pneg %p196
        $region38: #{tpu_custom_call.1} parent=11 // pred_check_branch
          %320 = sbr.rel (%p318) target = $region40
        $region39: #{tpu_custom_call.1} parent=11 // pred_region
          %s322 = ssub.s32 16, 16
          %323 = vsyncadd [#allocation4], %s322
          %s325 = sshll.u32 %s7, 4
          %s326 = int_to_ptr.vmem [resolvable:$true] %s325
          %328 = dma.vmem_to_smem %s326, 16, [#allocation2], [#allocation4]
        $region40: #{tpu_custom_call.1} parent=11 // pred_fallthru
          _
        // Predicated region
        $region41: #{tpu_custom_call.1} parent=11 // pred_check
          %p329 = pneg %p217
        $region42: #{tpu_custom_call.1} parent=11 // pred_check_branch
          %331 = sbr.rel (%p329) target = $region44
        $region43: #{tpu_custom_call.1} parent=11 // pred_region
          %s333 = ssub.s32 16, 16
          %334 = vsyncadd [#allocation6], %s333
          %s336 = sshll.u32 %s8, 4
          %s337 = int_to_ptr.vmem [resolvable:$true] %s336
          %339 = dma.vmem_to_smem %s337, 16, [#allocation5], [#allocation6]
        $region44: #{tpu_custom_call.1} parent=11 // pred_fallthru
          _
        // Predicated region
        $region45: #{tpu_custom_call.1} parent=11 // pred_check
          %p340 = pneg %p238
        $region46: #{tpu_custom_call.1} parent=11 // pred_check_branch
          %342 = sbr.rel (%p340) target = $region48
        $region47: #{tpu_custom_call.1} parent=11 // pred_region
          %s344 = ssub.s32 16, 16
          %345 = vsyncadd [#allocation6], %s344
          %s347 = sshll.u32 %s9, 4
          %s348 = int_to_ptr.vmem [resolvable:$true] %s347
          %350 = dma.vmem_to_smem %s348, 16, [#allocation7], [#allocation6]
        $region48: #{tpu_custom_call.1} parent=11 // pred_fallthru
          _
        // Predicated region
        $region49: #{tpu_custom_call.1} parent=11 // pred_check
          %p351 = pneg %p259
        $region50: #{tpu_custom_call.1} parent=11 // pred_check_branch
          %353 = sbr.rel (%p351) target = $region52
        $region51: #{tpu_custom_call.1} parent=11 // pred_region
          %s355 = ssub.s32 16, 16
          %356 = vsyncadd [#allocation9], %s355
          %s358 = sshll.u32 %s10, 4
          %s359 = int_to_ptr.vmem [resolvable:$true] %s358
          %361 = dma.vmem_to_smem %s359, 16, [#allocation8], [#allocation9]
        $region52: #{tpu_custom_call.1} parent=11 // pred_fallthru
          _
      $region12: #{tpu_custom_call.1} parent=5 // pred_fallthru
        _
      %p362 = scmp.lt.s32.totalorder %s23, 2
      // Predicated region
      $region53: #{tpu_custom_call.1} parent=5 // pred_check
        %p363 = pneg %p362
      $region54: #{tpu_custom_call.1} parent=5 // pred_check_branch
        %365 = sbr.rel (%p363) target = $region56
      $region55: #{tpu_custom_call.1} parent=5 // pred_region
        // Predicated region
        $region57: #{tpu_custom_call.1} parent=55 // pred_check
          %p366 = pneg %p43
        $region58: #{tpu_custom_call.1} parent=55 // pred_check_branch
          %368 = sbr.rel (%p366) target = $region60
        $region59: #{tpu_custom_call.1} parent=55 // pred_region
          %p369 = scmp.lt.s32.totalorder %s23, 1
          %s370 = scalar_select %p369, %s23, 1
          %s371 = smul.addr %s370, 2
          %s372 = smul.addr %s371, 4
          %s373 = scalar_lea.vmem %s0, %s372
        $region60: #{tpu_custom_call.1} parent=55 // pred_fallthru
          _
      $region56: #{tpu_custom_call.1} parent=5 // pred_fallthru
        _
      %p374 = scmp.le.s32.totalorder 1, %s23
      %p375 = scmp.lt.s32.totalorder %s23, 3
      %p376 = pnand %p374, %p375
      %p377 = pneg %p376
      // Predicated region
      $region61: #{tpu_custom_call.1} parent=5 // pred_check
        _
      $region62: #{tpu_custom_call.1} parent=5 // pred_check_branch
        %379 = sbr.rel (%p376) target = $region64
      $region63: #{tpu_custom_call.1} parent=5 // pred_region
        %s380 = ssub.s32 %s23, 1
        // Predicated region
        $region65: #{tpu_custom_call.1} parent=63 // pred_check
          %p381 = pneg %p196
        $region66: #{tpu_custom_call.1} parent=63 // pred_check_branch
          %383 = sbr.rel (%p381) target = $region68
        $region67: #{tpu_custom_call.1} parent=63 // pred_region
          %384 = dma.done [#allocation4], 16
        $region68: #{tpu_custom_call.1} parent=63 // pred_fallthru
          _
        // Predicated region
        $region69: #{tpu_custom_call.1} parent=63 // pred_check
          %p385 = pneg %p217
        $region70: #{tpu_custom_call.1} parent=63 // pred_check_branch
          %387 = sbr.rel (%p385) target = $region72
        $region71: #{tpu_custom_call.1} parent=63 // pred_region
          %388 = dma.done [#allocation6], 16
        $region72: #{tpu_custom_call.1} parent=63 // pred_fallthru
          _
        // Predicated region
        $region73: #{tpu_custom_call.1} parent=63 // pred_check
          %p389 = pneg %p238
        $region74: #{tpu_custom_call.1} parent=63 // pred_check_branch
          %391 = sbr.rel (%p389) target = $region76
        $region75: #{tpu_custom_call.1} parent=63 // pred_region
          %392 = dma.done [#allocation6], 16
        $region76: #{tpu_custom_call.1} parent=63 // pred_fallthru
          _
        // Predicated region
        $region77: #{tpu_custom_call.1} parent=63 // pred_check
          %p393 = pneg %p259
        $region78: #{tpu_custom_call.1} parent=63 // pred_check_branch
          %395 = sbr.rel (%p393) target = $region80
        $region79: #{tpu_custom_call.1} parent=63 // pred_region
          %396 = dma.done [#allocation9], 16
        $region80: #{tpu_custom_call.1} parent=63 // pred_fallthru
          _
        %397 = sfence
        %p398 = scmp.lt.s32.totalorder %s28, 1
        %s399 = scalar_select %p398, %s28, 1
        %s400 = smul.addr %s399, 2
        %s401 = smul.addr %s400, 4
        %s402 = scalar_lea.vmem %s0, %s401
        %p403 = pneg %p49
        %p404 = pneg %p46
        %p405 = pneg %p70
        %p406 = pneg %p67
        %p407 = pneg %p91
        %p408 = pneg %p88
        %p409 = pneg %p112
        %p410 = pneg %p109
        %p411 = pneg %p133
        %p412 = pneg %p130
        %p413 = pneg %p154
        %p414 = pneg %p151
        %p415 = pneg %p175
        %p416 = pneg %p172
        %p417 = pneg %p196
        %p418 = pneg %p193
        %p419 = pneg %p217
        %p420 = pneg %p214
        %p421 = pneg %p238
        %p422 = pneg %p235
        %p423 = pneg %p259
        %p424 = pneg %p256
        %p425 = pneg %p285
        %p426 = pneg %p282
        %s427 = sand.u32 %s272, 1
        %s428 = scalar_lea.sflag [#allocation3], %s427
        %s429 = sand.u32 %s272, 1
        %s430 = smul.addr %s429, 8
        %s431 = scalar_lea.vmem [#allocation10], %s430
        %p432 = scmp.lt.s32.totalorder %s28, 1
        %s433 = scalar_select %p432, %s28, 1
        %s434 = smul.addr %s433, 2
        %s435 = smul.addr %s434, 4
        %s436 = scalar_lea.vmem %s0, %s435
        %v437 = vld [vmem:[%s436] sm:$0xff]
        %v438 = vld [vmem:[%s1] sm:$0xf]
        %v439 = vld [vmem:[%s2] sm:$0xf]
        %441 = vset.pattern.permute.xlu0 0
        %442 = vperm.xlu0 %441, %v439
        %v443 = vpop.permute.xlu0 %442
        %v446 = vcombine.high %v437, %v437
        %vm447 = vcmask 31744
        %v449 = vsel %vm447, %v438, 0
        %vm451 = vcmask 1043456
        %v452 = vsel %vm451, %v437, 0
        %v454 = vsel %vm451, %v446, 0
        %456 = vmatprep.subr.mxu0 0.0
        %457 = vmatpush1.msra.mxu0 0.0
        %458 = vmatprep.subr.mxu0 0.0
        %459 = vmatpush1.msra.mxu0 0.0
        %460 = vmatprep.subr.mxu0 0.0
        %461 = vmatpush1.msra.mxu0 0.0
        %462 = vmatprep.subr.mxu0 0.0
        %463 = vmatpush1.msra.mxu0 0.0
        %464 = vmatprep.subr.mxu0 0.0
        %465 = vmatpush1.msra.mxu0 0.0
        %466 = vmatprep.subr.mxu0 0.0
        %467 = vmatpush1.msra.mxu0 0.0
        %468 = vmatprep.subr.mxu0 0.0
        %469 = vmatpush1.msra.mxu0 0.0
        %470 = vmatprep.subr.mxu0 0.0
        %471 = vmatpush1.msra.mxu0 0.0
        %472 = vmatprep.subr.mxu0 0.0
        %473 = vmatpush1.msra.mxu0 0.0
        %474 = vmatprep.subr.mxu0 0.0
        %475 = vmatpush1.msra.mxu0 0.0
        %476 = vmatprep.subr.mxu0 0.0
        %477 = vmatpush1.msra.mxu0 0.0
        %478 = vmatprep.subr.mxu0 0.0
        %479 = vmatpush1.msra.mxu0 0.0
        %480 = vmatprep.subr.mxu0 0.0
        %481 = vmatpush1.msra.mxu0 0.0
        %482 = vmatprep.subr.mxu0 0.0
        %483 = vmatpush1.msra.mxu0 0.0
        %484 = vmatprep.subr.mxu0 0.0
        %485 = vmatpush1.msra.mxu0 0.0
        %486 = vmatprep.subr.mxu0 %v454
        %487 = vmatpush1.msra.mxu0 %v452
        %488 = vmatprep.subr.mxu0 0.0
        %489 = vmatpush2.msra.mxu0 0.0
        %490 = vmatprep.subr.mxu0 0.0
        %491 = vmatpush2.msra.mxu0 0.0
        %492 = vmatprep.subr.mxu0 0.0
        %493 = vmatpush2.msra.mxu0 0.0
        %494 = vmatprep.subr.mxu0 0.0
        %495 = vmatpush2.msra.mxu0 0.0
        %496 = vmatprep.subr.mxu0 0.0
        %497 = vmatpush2.msra.mxu0 0.0
        %498 = vmatprep.subr.mxu0 0.0
        %499 = vmatpush2.msra.mxu0 0.0
        %500 = vmatprep.subr.mxu0 0.0
        %501 = vmatpush2.msra.mxu0 0.0
        %502 = vmatprep.subr.mxu0 0.0
        %503 = vmatpush2.msra.mxu0 0.0
        %504 = vmatprep.subr.mxu0 0.0
        %505 = vmatpush2.msra.mxu0 0.0
        %506 = vmatprep.subr.mxu0 0.0
        %507 = vmatpush2.msra.mxu0 0.0
        %508 = vmatprep.subr.mxu0 0.0
        %509 = vmatpush2.msra.mxu0 0.0
        %510 = vmatprep.subr.mxu0 0.0
        %511 = vmatpush2.msra.mxu0 0.0
        %512 = vmatprep.subr.mxu0 0.0
        %513 = vmatpush2.msra.mxu0 0.0
        %514 = vmatprep.subr.mxu0 0.0
        %515 = vmatpush2.msra.mxu0 0.0
        %516 = vmatprep.subr.mxu0 0.0
        %517 = vmatpush2.msra.mxu0 0.0
        %518 = vmatprep.subr.mxu0 0.0
        %519 = vmatpush2.msra.mxu0 0.0
        %520 = vmatprep.mubr.f32.mxu0 0.0
        %521 = vmatmul.mubr.f32.gmra.mxu0 %v449
        %v522 = vpop.f32.mrf.mxu0
        %v523 = vadd.f32 %v443, %v522
        %v524 = vpop.f32.mrf.mxu0
        %v525 = vadd.f32 %v443, %v524
        %526 = vdwg.mxu0
        %v527 = vmul.f32 %v437, 2.0
        %v528 = vxor.u32 %v523, 2147483648
        %v529 = vxor.u32 %v525, 2147483648
        %v530 = vmul.f32 %v528, 1.442695
        %v531 = vpow.pop %v530
        %v532 = vmul.f32 %v529, 1.442695
        %v533 = vpow.pop %v532
        %v534 = vadd.f32 %v531, 1.0
        %v535 = vadd.f32 %v533, 1.0
        %v536 = vrcp.pop %v534
        %v537 = vmul.f32 1.0, %v536
        %v538 = vrcp.pop %v535
        %v539 = vmul.f32 1.0, %v538
        %v542 = vcombine.low %v537, %v539
        %v544 = vmul.f32 %v527, %v542
        %v546 = vrot.slane %v544, 4
        %v548 = vmax.f32 %v544, %v546
        %v549 = vadd.f32 %v544, %v546
        %551 = vrot.lane.b32.xlu0 %v548, 64
        %v552 = vpop.permute.xlu0 %551
        %v554 = vmax.f32 %v548, %v552
        %556 = vrot.lane.b32.xlu0 %v549, 64
        %v557 = vpop.permute.xlu0 %556
        %v559 = vadd.f32 %v549, %v557
        %561 = vrot.lane.b32.xlu0 %v554, 96
        %v562 = vpop.permute.xlu0 %561
        %v564 = vmax.f32 %v554, %v562
        %566 = vrot.lane.b32.xlu0 %v559, 96
        %v567 = vpop.permute.xlu0 %566
        %v569 = vadd.f32 %v559, %v567
        %571 = vrot.lane.b32.xlu0 %v564, 112
        %v572 = vpop.permute.xlu0 %571
        %v574 = vmax.f32 %v564, %v572
        %576 = vrot.lane.b32.xlu0 %v569, 112
        %v577 = vpop.permute.xlu0 %576
        %v579 = vadd.f32 %v569, %v577
        %v580 = vmul.f32 %v579, 0.0625
        %v581 = vld [vmem:[%s3] sm:$0xff]
        %v582 = vld [vmem:[%s3 + $0x8] sm:$0xff]
        %v583 = vld [vmem:[%s3 + $0x10] sm:$0xff]
        %v584 = vld [vmem:[%s3 + $0x18] sm:$0xff]
        %v585 = vld [vmem:[%s3 + $0x20] sm:$0xff]
        %v586 = vld [vmem:[%s3 + $0x28] sm:$0xff]
        %v587 = vld [vmem:[%s3 + $0x30] sm:$0xff]
        %v588 = vld [vmem:[%s3 + $0x38] sm:$0xff]
        %v589 = vld [vmem:[%s3 + $0x40] sm:$0xff]
        %v590 = vld [vmem:[%s3 + $0x48] sm:$0xff]
        %v591 = vld [vmem:[%s3 + $0x50] sm:$0xff]
        %v592 = vld [vmem:[%s3 + $0x58] sm:$0xff]
        %v593 = vld [vmem:[%s3 + $0x60] sm:$0xff]
        %v594 = vld [vmem:[%s3 + $0x68] sm:$0xff]
        %v595 = vld [vmem:[%s3 + $0x70] sm:$0xff]
        %v596 = vld [vmem:[%s3 + $0x78] sm:$0xff]
        %v597 = vld [vmem:[%s3 + $0x80] sm:$0xff]
        %v598 = vld [vmem:[%s3 + $0x88] sm:$0xff]
        %v599 = vld [vmem:[%s3 + $0x90] sm:$0xff]
        %v600 = vld [vmem:[%s3 + $0x98] sm:$0xff]
        %v601 = vld [vmem:[%s3 + $0xa0] sm:$0xff]
        %v602 = vld [vmem:[%s3 + $0xa8] sm:$0xff]
        %v603 = vld [vmem:[%s3 + $0xb0] sm:$0xff]
        %v604 = vld [vmem:[%s3 + $0xb8] sm:$0xff]
        %v605 = vld [vmem:[%s3 + $0xc0] sm:$0xff]
        %v606 = vld [vmem:[%s3 + $0xc8] sm:$0xff]
        %v607 = vld [vmem:[%s3 + $0xd0] sm:$0xff]
        %v608 = vld [vmem:[%s3 + $0xd8] sm:$0xff]
        %v609 = vld [vmem:[%s3 + $0xe0] sm:$0xff]
        %v610 = vld [vmem:[%s3 + $0xe8] sm:$0xff]
        %v611 = vld [vmem:[%s3 + $0xf0] sm:$0xff]
        %v612 = vld [vmem:[%s3 + $0xf8] sm:$0xff]
        %v613 = vcombine.high %v544, %v544
        %615 = vmatprep.subr.mxu0 0.0
        %616 = vmatpush1.msra.mxu0 %v596
        %617 = vmatprep.subr.mxu0 0.0
        %618 = vmatpush1.msra.mxu0 %v595
        %619 = vmatprep.subr.mxu0 0.0
        %620 = vmatpush1.msra.mxu0 %v594
        %621 = vmatprep.subr.mxu0 0.0
        %622 = vmatpush1.msra.mxu0 %v593
        %623 = vmatprep.subr.mxu0 0.0
        %624 = vmatpush1.msra.mxu0 %v592
        %625 = vmatprep.subr.mxu0 0.0
        %626 = vmatpush1.msra.mxu0 %v591
        %627 = vmatprep.subr.mxu0 0.0
        %628 = vmatpush1.msra.mxu0 %v590
        %629 = vmatprep.subr.mxu0 0.0
        %630 = vmatpush1.msra.mxu0 %v589
        %631 = vmatprep.subr.mxu0 0.0
        %632 = vmatpush1.msra.mxu0 %v588
        %633 = vmatprep.subr.mxu0 0.0
        %634 = vmatpush1.msra.mxu0 %v587
        %635 = vmatprep.subr.mxu0 0.0
        %636 = vmatpush1.msra.mxu0 %v586
        %637 = vmatprep.subr.mxu0 0.0
        %638 = vmatpush1.msra.mxu0 %v585
        %639 = vmatprep.subr.mxu0 0.0
        %640 = vmatpush1.msra.mxu0 %v584
        %641 = vmatprep.subr.mxu0 0.0
        %642 = vmatpush1.msra.mxu0 %v583
        %643 = vmatprep.subr.mxu0 0.0
        %644 = vmatpush1.msra.mxu0 %v582
        %645 = vmatprep.subr.mxu0 0.0
        %646 = vmatpush1.msra.mxu0 %v581
        %647 = vmatprep.subr.mxu0 0.0
        %648 = vmatpush2.msra.mxu0 %v612
        %649 = vmatprep.subr.mxu0 0.0
        %650 = vmatpush2.msra.mxu0 %v611
        %651 = vmatprep.subr.mxu0 0.0
        %652 = vmatpush2.msra.mxu0 %v610
        %653 = vmatprep.subr.mxu0 0.0
        %654 = vmatpush2.msra.mxu0 %v609
        %655 = vmatprep.subr.mxu0 0.0
        %656 = vmatpush2.msra.mxu0 %v608
        %657 = vmatprep.subr.mxu0 0.0
        %658 = vmatpush2.msra.mxu0 %v607
        %659 = vmatprep.subr.mxu0 0.0
        %660 = vmatpush2.msra.mxu0 %v606
        %661 = vmatprep.subr.mxu0 0.0
        %662 = vmatpush2.msra.mxu0 %v605
        %663 = vmatprep.subr.mxu0 0.0
        %664 = vmatpush2.msra.mxu0 %v604
        %665 = vmatprep.subr.mxu0 0.0
        %666 = vmatpush2.msra.mxu0 %v603
        %667 = vmatprep.subr.mxu0 0.0
        %668 = vmatpush2.msra.mxu0 %v602
        %669 = vmatprep.subr.mxu0 0.0
        %670 = vmatpush2.msra.mxu0 %v601
        %671 = vmatprep.subr.mxu0 0.0
        %672 = vmatpush2.msra.mxu0 %v600
        %673 = vmatprep.subr.mxu0 0.0
        %674 = vmatpush2.msra.mxu0 %v599
        %675 = vmatprep.subr.mxu0 0.0
        %676 = vmatpush2.msra.mxu0 %v598
        %677 = vmatprep.subr.mxu0 0.0
        %678 = vmatpush2.msra.mxu0 %v597
        %679 = vmatprep.mubr.f32.mxu0 %v613
        %680 = vmatmul.mubr.f32.gmra.mxu0 %v544
        %v681 = vpop.f32.mrf.mxu0
        %v682 = vadd.f32 0.0, %v681
        %v683 = vpop.f32.mrf.mxu0
        %684 = vdwg.mxu0
        %v685 = vmul.f32 %v682, 0.0625
        %686 = vrot.lane.b32.xlu0 %v544, 127
        %v687 = vpop.permute.xlu0 %686
        %688 = vrot.lane.b32.xlu0 %v613, 127
        %v689 = vpop.permute.xlu0 %688
        %vm690 = vcmask 1039360
        %v691 = vsel %vm690, %v687, %v689
        %v693 = vsel %vm690, %v689, -1e+30
        %v695 = vcombine.low %v691, %v693
        %v697 = vmax.f32 %v544, %v695
        %v699 = vcombine.high %v697, %v697
        %700 = vrot.lane.b32.xlu0 %v697, 126
        %v701 = vpop.permute.xlu0 %700
        %702 = vrot.lane.b32.xlu0 %v699, 126
        %v703 = vpop.permute.xlu0 %702
        %vm704 = vcmask 1031168
        %v705 = vsel %vm704, %v701, %v703
        %v707 = vsel %vm704, %v703, -1e+30
        %v709 = vcombine.low %v705, %v707
        %v711 = vmax.f32 %v697, %v709
        %v713 = vcombine.high %v711, %v711
        %714 = vrot.lane.b32.xlu0 %v711, 124
        %v715 = vpop.permute.xlu0 %714
        %716 = vrot.lane.b32.xlu0 %v713, 124
        %v717 = vpop.permute.xlu0 %716
        %vm718 = vcmask 1014784
        %v719 = vsel %vm718, %v715, %v717
        %v721 = vsel %vm718, %v717, -1e+30
        %v723 = vcombine.low %v719, %v721
        %v725 = vmax.f32 %v711, %v723
        %v727 = vcombine.high %v725, %v725
        %728 = vrot.lane.b32.xlu0 %v725, 120
        %v729 = vpop.permute.xlu0 %728
        %730 = vrot.lane.b32.xlu0 %v727, 120
        %v731 = vpop.permute.xlu0 %730
        %vm732 = vcmask 982016
        %v733 = vsel %vm732, %v729, %v731
        %v735 = vsel %vm732, %v731, -1e+30
        %v737 = vcombine.low %v733, %v735
        %v739 = vmax.f32 %v725, %v737
        %v740 = vld [vmem:[%s4] sm:$0xff]
        %v741 = vld [vmem:[%s4 + $0x8] sm:$0xff]
        %v742 = vld [vmem:[%s4 + $0x10] sm:$0xff]
        %v743 = vld [vmem:[%s4 + $0x18] sm:$0xff]
        %v744 = vld [vmem:[%s4 + $0x20] sm:$0xff]
        %v745 = vld [vmem:[%s4 + $0x28] sm:$0xff]
        %v746 = vld [vmem:[%s4 + $0x30] sm:$0xff]
        %v747 = vld [vmem:[%s4 + $0x38] sm:$0xff]
        %v748 = vld [vmem:[%s4 + $0x40] sm:$0xff]
        %v749 = vld [vmem:[%s4 + $0x48] sm:$0xff]
        %v750 = vld [vmem:[%s4 + $0x50] sm:$0xff]
        %v751 = vld [vmem:[%s4 + $0x58] sm:$0xff]
        %v752 = vld [vmem:[%s4 + $0x60] sm:$0xff]
        %v753 = vld [vmem:[%s4 + $0x68] sm:$0xff]
        %v754 = vld [vmem:[%s4 + $0x70] sm:$0xff]
        %v755 = vld [vmem:[%s4 + $0x78] sm:$0xff]
        %v756 = vld [vmem:[%s4 + $0x80] sm:$0xff]
        %v757 = vld [vmem:[%s4 + $0x88] sm:$0xff]
        %v758 = vld [vmem:[%s4 + $0x90] sm:$0xff]
        %v759 = vld [vmem:[%s4 + $0x98] sm:$0xff]
        %v760 = vld [vmem:[%s4 + $0xa0] sm:$0xff]
        %v761 = vld [vmem:[%s4 + $0xa8] sm:$0xff]
        %v762 = vld [vmem:[%s4 + $0xb0] sm:$0xff]
        %v763 = vld [vmem:[%s4 + $0xb8] sm:$0xff]
        %v764 = vld [vmem:[%s4 + $0xc0] sm:$0xff]
        %v765 = vld [vmem:[%s4 + $0xc8] sm:$0xff]
        %v766 = vld [vmem:[%s4 + $0xd0] sm:$0xff]
        %v767 = vld [vmem:[%s4 + $0xd8] sm:$0xff]
        %v768 = vld [vmem:[%s4 + $0xe0] sm:$0xff]
        %v769 = vld [vmem:[%s4 + $0xe8] sm:$0xff]
        %v770 = vld [vmem:[%s4 + $0xf0] sm:$0xff]
        %v771 = vld [vmem:[%s4 + $0xf8] sm:$0xff]
        %v773 = vcombine.high %v739, %v739
        %775 = vmatprep.subr.mxu0 0.0
        %776 = vmatpush1.msra.mxu0 %v755
        %777 = vmatprep.subr.mxu0 0.0
        %778 = vmatpush1.msra.mxu0 %v754
        %779 = vmatprep.subr.mxu0 0.0
        %780 = vmatpush1.msra.mxu0 %v753
        %781 = vmatprep.subr.mxu0 0.0
        %782 = vmatpush1.msra.mxu0 %v752
        %783 = vmatprep.subr.mxu0 0.0
        %784 = vmatpush1.msra.mxu0 %v751
        %785 = vmatprep.subr.mxu0 0.0
        %786 = vmatpush1.msra.mxu0 %v750
        %787 = vmatprep.subr.mxu0 0.0
        %788 = vmatpush1.msra.mxu0 %v749
        %789 = vmatprep.subr.mxu0 0.0
        %790 = vmatpush1.msra.mxu0 %v748
        %791 = vmatprep.subr.mxu0 0.0
        %792 = vmatpush1.msra.mxu0 %v747
        %793 = vmatprep.subr.mxu0 0.0
        %794 = vmatpush1.msra.mxu0 %v746
        %795 = vmatprep.subr.mxu0 0.0
        %796 = vmatpush1.msra.mxu0 %v745
        %797 = vmatprep.subr.mxu0 0.0
        %798 = vmatpush1.msra.mxu0 %v744
        %799 = vmatprep.subr.mxu0 0.0
        %800 = vmatpush1.msra.mxu0 %v743
        %801 = vmatprep.subr.mxu0 0.0
        %802 = vmatpush1.msra.mxu0 %v742
        %803 = vmatprep.subr.mxu0 0.0
        %804 = vmatpush1.msra.mxu0 %v741
        %805 = vmatprep.subr.mxu0 0.0
        %806 = vmatpush1.msra.mxu0 %v740
        %807 = vmatprep.subr.mxu0 0.0
        %808 = vmatpush2.msra.mxu0 %v771
        %809 = vmatprep.subr.mxu0 0.0
        %810 = vmatpush2.msra.mxu0 %v770
        %811 = vmatprep.subr.mxu0 0.0
        %812 = vmatpush2.msra.mxu0 %v769
        %813 = vmatprep.subr.mxu0 0.0
        %814 = vmatpush2.msra.mxu0 %v768
        %815 = vmatprep.subr.mxu0 0.0
        %816 = vmatpush2.msra.mxu0 %v767
        %817 = vmatprep.subr.mxu0 0.0
        %818 = vmatpush2.msra.mxu0 %v766
        %819 = vmatprep.subr.mxu0 0.0
        %820 = vmatpush2.msra.mxu0 %v765
        %821 = vmatprep.subr.mxu0 0.0
        %822 = vmatpush2.msra.mxu0 %v764
        %823 = vmatprep.subr.mxu0 0.0
        %824 = vmatpush2.msra.mxu0 %v763
        %825 = vmatprep.subr.mxu0 0.0
        %826 = vmatpush2.msra.mxu0 %v762
        %827 = vmatprep.subr.mxu0 0.0
        %828 = vmatpush2.msra.mxu0 %v761
        %829 = vmatprep.subr.mxu0 0.0
        %830 = vmatpush2.msra.mxu0 %v760
        %831 = vmatprep.subr.mxu0 0.0
        %832 = vmatpush2.msra.mxu0 %v759
        %833 = vmatprep.subr.mxu0 0.0
        %834 = vmatpush2.msra.mxu0 %v758
        %835 = vmatprep.subr.mxu0 0.0
        %836 = vmatpush2.msra.mxu0 %v757
        %837 = vmatprep.subr.mxu0 0.0
        %838 = vmatpush2.msra.mxu0 %v756
        %839 = vmatprep.mubr.f32.mxu0 %v773
        %840 = vmatmul.mubr.f32.gmra.mxu0 %v739
        %v841 = vpop.f32.mrf.mxu0
        %v842 = vadd.f32 0.0, %v841
        %v843 = vpop.f32.mrf.mxu0
        %844 = vdwg.mxu0
        %s845 = sld [smem:[#allocation2]]
        %s846 = sld [smem:[#allocation2 + $0x1]]
        %s847 = sld [smem:[#allocation2 + $0x2]]
        %s848 = sld [smem:[#allocation2 + $0x3]]
        %s849 = sld [smem:[#allocation2 + $0x4]]
        %s850 = sld [smem:[#allocation2 + $0x5]]
        %s851 = sld [smem:[#allocation2 + $0x6]]
        %s852 = sld [smem:[#allocation2 + $0x7]]
        %s853 = sld [smem:[#allocation2 + $0x8]]
        %s854 = sld [smem:[#allocation2 + $0x9]]
        %s855 = sld [smem:[#allocation2 + $0xa]]
        %s856 = sld [smem:[#allocation2 + $0xb]]
        %s857 = sld [smem:[#allocation2 + $0xc]]
        %s858 = sld [smem:[#allocation2 + $0xd]]
        %s859 = sld [smem:[#allocation2 + $0xe]]
        %s860 = sld [smem:[#allocation2 + $0xf]]
        %s861 = sld [smem:[#allocation2 + $0x10]]
        %s862 = sld [smem:[#allocation2 + $0x11]]
        %s863 = sld [smem:[#allocation7]]
        %s864 = sld [smem:[#allocation7 + $0x1]]
        %s865 = sld [smem:[#allocation7 + $0x2]]
        %s866 = sld [smem:[#allocation7 + $0x3]]
        %s867 = sld [smem:[#allocation7 + $0x4]]
        %s868 = sld [smem:[#allocation7 + $0x5]]
        %s869 = sld [smem:[#allocation7 + $0x6]]
        %s870 = sld [smem:[#allocation7 + $0x7]]
        %s871 = sld [smem:[#allocation7 + $0x8]]
        %s872 = sld [smem:[#allocation7 + $0x9]]
        %s873 = sld [smem:[#allocation7 + $0xa]]
        %s874 = sld [smem:[#allocation7 + $0xb]]
        %s875 = sld [smem:[#allocation7 + $0xc]]
        %s876 = sld [smem:[#allocation7 + $0xd]]
        %s877 = sld [smem:[#allocation7 + $0xe]]
        %s878 = sld [smem:[#allocation7 + $0xf]]
        %s879 = sld [smem:[#allocation7 + $0x10]]
        %s880 = sld [smem:[#allocation7 + $0x11]]
        %v882 = vrot.slane %v574, 7
        %vm884 = vcmask 1040384
        %v885 = vsel %vm884, 0.0, %v882
        %vm886 = vcmask 1044480
        %v887 = vsel %vm886, %v885, 0.0
        %889 = vrot.lane.b32.xlu0 %v887, 1
        %v890 = vpop.permute.xlu0 %889
        %vm892 = vcmask 7168
        %v893 = vsel %vm892, 0.0, %v890
        %vm894 = vcmask 138240
        %v895 = vsel %vm894, %v893, 0.0
        %v896 = vstv %s845
        %v897 = vmul.f32 %v896, %v895
        %v898 = vadd.f32 %v897, 0.0
        %v899 = vstv %s846
        %v900 = vmul.f32 %v899, %v895
        %902 = vrot.lane.b32.xlu0 %v900, 127
        %v903 = vpop.permute.xlu0 %902
        %v905 = vadd.f32 %v898, %v903
        %v906 = vstv %s847
        %v907 = vmul.f32 %v906, %v895
        %909 = vrot.lane.b32.xlu0 %v907, 126
        %v910 = vpop.permute.xlu0 %909
        %v912 = vadd.f32 %v905, %v910
        %v913 = vstv %s848
        %v914 = vmul.f32 %v913, %v895
        %v916 = vrot.slane %v914, 1
        %v918 = vadd.f32 %v912, %v916
        %v919 = vstv %s849
        %v920 = vmul.f32 %v919, %v895
        %v922 = vrot.slane %v920, 1
        %923 = vrot.lane.b32.xlu0 %v922, 127
        %v924 = vpop.permute.xlu0 %923
        %v926 = vadd.f32 %v918, %v924
        %v927 = vstv %s850
        %v928 = vmul.f32 %v927, %v895
        %v930 = vrot.slane %v928, 1
        %931 = vrot.lane.b32.xlu0 %v930, 126
        %v932 = vpop.permute.xlu0 %931
        %v934 = vadd.f32 %v926, %v932
        %v935 = vstv %s851
        %v936 = vmul.f32 %v935, %v895
        %v938 = vrot.slane %v936, 2
        %v940 = vadd.f32 %v934, %v938
        %v941 = vstv %s852
        %v942 = vmul.f32 %v941, %v895
        %v944 = vrot.slane %v942, 2
        %945 = vrot.lane.b32.xlu0 %v944, 127
        %v946 = vpop.permute.xlu0 %945
        %v948 = vadd.f32 %v940, %v946
        %v949 = vstv %s853
        %v950 = vmul.f32 %v949, %v895
        %v952 = vrot.slane %v950, 2
        %953 = vrot.lane.b32.xlu0 %v952, 126
        %v954 = vpop.permute.xlu0 %953
        %v956 = vadd.f32 %v948, %v954
        %v958 = vrot.slane %v580, 7
        %v960 = vsel %vm884, 0.0, %v958
        %v961 = vsel %vm886, %v960, 0.0
        %963 = vrot.lane.b32.xlu0 %v961, 1
        %v964 = vpop.permute.xlu0 %963
        %v966 = vsel %vm892, 0.0, %v964
        %v967 = vsel %vm894, %v966, 0.0
        %v968 = vstv %s854
        %v969 = vmul.f32 %v968, %v967
        %v970 = vadd.f32 %v956, %v969
        %v971 = vstv %s855
        %v972 = vmul.f32 %v971, %v967
        %974 = vrot.lane.b32.xlu0 %v972, 127
        %v975 = vpop.permute.xlu0 %974
        %v977 = vadd.f32 %v970, %v975
        %v978 = vstv %s856
        %v979 = vmul.f32 %v978, %v967
        %981 = vrot.lane.b32.xlu0 %v979, 126
        %v982 = vpop.permute.xlu0 %981
        %v984 = vadd.f32 %v977, %v982
        %v985 = vstv %s857
        %v986 = vmul.f32 %v985, %v967
        %v988 = vrot.slane %v986, 1
        %v990 = vadd.f32 %v984, %v988
        %v991 = vstv %s858
        %v992 = vmul.f32 %v991, %v967
        %v994 = vrot.slane %v992, 1
        %995 = vrot.lane.b32.xlu0 %v994, 127
        %v996 = vpop.permute.xlu0 %995
        %v998 = vadd.f32 %v990, %v996
        %v999 = vstv %s859
        %v1000 = vmul.f32 %v999, %v967
        %v1002 = vrot.slane %v1000, 1
        %1003 = vrot.lane.b32.xlu0 %v1002, 126
        %v1004 = vpop.permute.xlu0 %1003
        %v1006 = vadd.f32 %v998, %v1004
        %v1007 = vstv %s860
        %v1008 = vmul.f32 %v1007, %v967
        %v1010 = vrot.slane %v1008, 2
        %v1012 = vadd.f32 %v1006, %v1010
        %v1013 = vstv %s861
        %v1014 = vmul.f32 %v1013, %v967
        %v1016 = vrot.slane %v1014, 2
        %1017 = vrot.lane.b32.xlu0 %v1016, 127
        %v1018 = vpop.permute.xlu0 %1017
        %v1020 = vadd.f32 %v1012, %v1018
        %v1021 = vstv %s862
        %v1022 = vmul.f32 %v1021, %v967
        %v1024 = vrot.slane %v1022, 2
        %1025 = vrot.lane.b32.xlu0 %v1024, 126
        %v1026 = vpop.permute.xlu0 %1025
        %v1028 = vadd.f32 %v1020, %v1026
        %s1029 = sld [smem:[#allocation5]]
        %v1030 = vstv %s1029
        %v1031 = vmul.f32 %v1028, %v1030
        %s1032 = sld [smem:[#allocation5 + $0x1]]
        %v1033 = vstv %s1032
        %v1034 = vadd.f32 %v1031, %v1033
        %v1035 = vxor.u32 %v1034, 2147483648
        %v1036 = vmul.f32 %v1035, 1.442695
        %v1037 = vpow.pop %v1036
        %v1038 = vadd.f32 %v1037, 1.0
        %v1039 = vrcp.pop %v1038
        %v1040 = vmul.f32 1.0, %v1039
        %v1042 = vrot.slane %v842, 7
        %v1044 = vsel %vm884, 0.0, %v1042
        %v1045 = vsel %vm886, %v1044, 0.0
        %1047 = vrot.lane.b32.xlu0 %v1045, 1
        %v1048 = vpop.permute.xlu0 %1047
        %v1050 = vsel %vm892, 0.0, %v1048
        %v1051 = vsel %vm894, %v1050, 0.0
        %v1052 = vstv %s863
        %v1053 = vmul.f32 %v1052, %v1051
        %v1054 = vadd.f32 %v1053, 0.0
        %v1055 = vstv %s866
        %v1056 = vmul.f32 %v1055, %v1051
        %1058 = vrot.lane.b32.xlu0 %v1056, 127
        %v1059 = vpop.permute.xlu0 %1058
        %v1061 = vadd.f32 %v1054, %v1059
        %v1062 = vstv %s869
        %v1063 = vmul.f32 %v1062, %v1051
        %1065 = vrot.lane.b32.xlu0 %v1063, 126
        %v1066 = vpop.permute.xlu0 %1065
        %v1068 = vadd.f32 %v1061, %v1066
        %v1069 = vstv %s864
        %v1070 = vmul.f32 %v1069, %v1051
        %v1072 = vrot.slane %v1070, 1
        %v1074 = vadd.f32 %v1068, %v1072
        %v1075 = vstv %s867
        %v1076 = vmul.f32 %v1075, %v1051
        %v1078 = vrot.slane %v1076, 1
        %1079 = vrot.lane.b32.xlu0 %v1078, 127
        %v1080 = vpop.permute.xlu0 %1079
        %v1082 = vadd.f32 %v1074, %v1080
        %v1083 = vstv %s870
        %v1084 = vmul.f32 %v1083, %v1051
        %v1086 = vrot.slane %v1084, 1
        %1087 = vrot.lane.b32.xlu0 %v1086, 126
        %v1088 = vpop.permute.xlu0 %1087
        %v1090 = vadd.f32 %v1082, %v1088
        %v1091 = vstv %s865
        %v1092 = vmul.f32 %v1091, %v1051
        %v1094 = vrot.slane %v1092, 2
        %v1096 = vadd.f32 %v1090, %v1094
        %v1097 = vstv %s868
        %v1098 = vmul.f32 %v1097, %v1051
        %v1100 = vrot.slane %v1098, 2
        %1101 = vrot.lane.b32.xlu0 %v1100, 127
        %v1102 = vpop.permute.xlu0 %1101
        %v1104 = vadd.f32 %v1096, %v1102
        %v1105 = vstv %s871
        %v1106 = vmul.f32 %v1105, %v1051
        %v1108 = vrot.slane %v1106, 2
        %1109 = vrot.lane.b32.xlu0 %v1108, 126
        %v1110 = vpop.permute.xlu0 %1109
        %v1112 = vadd.f32 %v1104, %v1110
        %v1114 = vrot.slane %v685, 7
        %v1116 = vsel %vm884, 0.0, %v1114
        %v1117 = vsel %vm886, %v1116, 0.0
        %1119 = vrot.lane.b32.xlu0 %v1117, 1
        %v1120 = vpop.permute.xlu0 %1119
        %v1122 = vsel %vm892, 0.0, %v1120
        %v1123 = vsel %vm894, %v1122, 0.0
        %v1124 = vstv %s872
        %v1125 = vmul.f32 %v1124, %v1123
        %v1126 = vadd.f32 %v1112, %v1125
        %v1127 = vstv %s875
        %v1128 = vmul.f32 %v1127, %v1123
        %1130 = vrot.lane.b32.xlu0 %v1128, 127
        %v1131 = vpop.permute.xlu0 %1130
        %v1133 = vadd.f32 %v1126, %v1131
        %v1134 = vstv %s878
        %v1135 = vmul.f32 %v1134, %v1123
        %1137 = vrot.lane.b32.xlu0 %v1135, 126
        %v1138 = vpop.permute.xlu0 %1137
        %v1140 = vadd.f32 %v1133, %v1138
        %v1141 = vstv %s873
        %v1142 = vmul.f32 %v1141, %v1123
        %v1144 = vrot.slane %v1142, 1
        %v1146 = vadd.f32 %v1140, %v1144
        %v1147 = vstv %s876
        %v1148 = vmul.f32 %v1147, %v1123
        %v1150 = vrot.slane %v1148, 1
        %1151 = vrot.lane.b32.xlu0 %v1150, 127
        %v1152 = vpop.permute.xlu0 %1151
        %v1154 = vadd.f32 %v1146, %v1152
        %v1155 = vstv %s879
        %v1156 = vmul.f32 %v1155, %v1123
        %v1158 = vrot.slane %v1156, 1
        %1159 = vrot.lane.b32.xlu0 %v1158, 126
        %v1160 = vpop.permute.xlu0 %1159
        %v1162 = vadd.f32 %v1154, %v1160
        %v1163 = vstv %s874
        %v1164 = vmul.f32 %v1163, %v1123
        %v1166 = vrot.slane %v1164, 2
        %v1168 = vadd.f32 %v1162, %v1166
        %v1169 = vstv %s877
        %v1170 = vmul.f32 %v1169, %v1123
        %v1172 = vrot.slane %v1170, 2
        %1173 = vrot.lane.b32.xlu0 %v1172, 127
        %v1174 = vpop.permute.xlu0 %1173
        %v1176 = vadd.f32 %v1168, %v1174
        %v1177 = vstv %s880
        %v1178 = vmul.f32 %v1177, %v1123
        %v1180 = vrot.slane %v1178, 2
        %1181 = vrot.lane.b32.xlu0 %v1180, 126
        %v1182 = vpop.permute.xlu0 %1181
        %v1184 = vadd.f32 %v1176, %v1182
        %s1185 = sld [smem:[#allocation8]]
        %v1186 = vstv %s1185
        %v1187 = vmul.f32 %v1184, %v1186
        %s1188 = sld [smem:[#allocation8 + $0x1]]
        %v1189 = vstv %s1188
        %v1190 = vadd.f32 %v1187, %v1189
        %v1191 = vxor.u32 %v1190, 2147483648
        %v1192 = vmul.f32 %v1191, 1.442695
        %v1193 = vpow.pop %v1192
        %v1194 = vadd.f32 %v1193, 1.0
        %v1195 = vrcp.pop %v1194
        %v1196 = vmul.f32 1.0, %v1195
        %v1197 = vld [vmem:[%s5] sm:$0xff]
        %v1198 = vld [vmem:[%s5 + $0x8] sm:$0xff]
        %v1199 = vld [vmem:[%s5 + $0x10] sm:$0xff]
        %v1200 = vld [vmem:[%s5 + $0x18] sm:$0xff]
        %v1201 = vld [vmem:[%s6] sm:$0xff]
        %v1202 = vld [vmem:[%s6 + $0x8] sm:$0xff]
        %v1203 = vld [vmem:[%s6 + $0x10] sm:$0xff]
        %v1204 = vld [vmem:[%s6 + $0x18] sm:$0xff]
        %vm1205 = vcmask 130048
        %v1207 = vsel %vm1205, %v1196, 0
        %1209 = vmatprep.subr.mxu0 0.0
        %1210 = vmatpush1.msra.mxu0 0.0
        %1211 = vmatprep.subr.mxu0 0.0
        %1212 = vmatpush1.msra.mxu0 0.0
        %1213 = vmatprep.subr.mxu0 0.0
        %1214 = vmatpush1.msra.mxu0 0.0
        %1215 = vmatprep.subr.mxu0 0.0
        %1216 = vmatpush1.msra.mxu0 0.0
        %1217 = vmatprep.subr.mxu0 0.0
        %1218 = vmatpush1.msra.mxu0 0.0
        %1219 = vmatprep.subr.mxu0 0.0
        %1220 = vmatpush1.msra.mxu0 0.0
        %1221 = vmatprep.subr.mxu0 0.0
        %1222 = vmatpush1.msra.mxu0 0.0
        %1223 = vmatprep.subr.mxu0 0.0
        %1224 = vmatpush1.msra.mxu0 0.0
        %1225 = vmatprep.subr.mxu0 0.0
        %1226 = vmatpush1.msra.mxu0 0.0
        %1227 = vmatprep.subr.mxu0 0.0
        %1228 = vmatpush1.msra.mxu0 0.0
        %1229 = vmatprep.subr.mxu0 0.0
        %1230 = vmatpush1.msra.mxu0 0.0
        %1231 = vmatprep.subr.mxu0 0.0
        %1232 = vmatpush1.msra.mxu0 0.0
        %1233 = vmatprep.subr.mxu0 0.0
        %1234 = vmatpush1.msra.mxu0 0.0
        %1235 = vmatprep.subr.mxu0 0.0
        %1236 = vmatpush1.msra.mxu0 0.0
        %1237 = vmatprep.subr.mxu0 %v1204
        %1238 = vmatpush1.msra.mxu0 %v1203
        %1239 = vmatprep.subr.mxu0 %v1202
        %1240 = vmatpush1.msra.mxu0 %v1201
        %1241 = vmatprep.subr.mxu0 0.0
        %1242 = vmatpush2.msra.mxu0 0.0
        %1243 = vmatprep.subr.mxu0 0.0
        %1244 = vmatpush2.msra.mxu0 0.0
        %1245 = vmatprep.subr.mxu0 0.0
        %1246 = vmatpush2.msra.mxu0 0.0
        %1247 = vmatprep.subr.mxu0 0.0
        %1248 = vmatpush2.msra.mxu0 0.0
        %1249 = vmatprep.subr.mxu0 0.0
        %1250 = vmatpush2.msra.mxu0 0.0
        %1251 = vmatprep.subr.mxu0 0.0
        %1252 = vmatpush2.msra.mxu0 0.0
        %1253 = vmatprep.subr.mxu0 0.0
        %1254 = vmatpush2.msra.mxu0 0.0
        %1255 = vmatprep.subr.mxu0 0.0
        %1256 = vmatpush2.msra.mxu0 0.0
        %1257 = vmatprep.subr.mxu0 0.0
        %1258 = vmatpush2.msra.mxu0 0.0
        %1259 = vmatprep.subr.mxu0 0.0
        %1260 = vmatpush2.msra.mxu0 0.0
        %1261 = vmatprep.subr.mxu0 0.0
        %1262 = vmatpush2.msra.mxu0 0.0
        %1263 = vmatprep.subr.mxu0 0.0
        %1264 = vmatpush2.msra.mxu0 0.0
        %1265 = vmatprep.subr.mxu0 0.0
        %1266 = vmatpush2.msra.mxu0 0.0
        %1267 = vmatprep.subr.mxu0 0.0
        %1268 = vmatpush2.msra.mxu0 0.0
        %1269 = vmatprep.subr.mxu0 0.0
        %1270 = vmatpush2.msra.mxu0 0.0
        %1271 = vmatprep.subr.mxu0 0.0
        %1272 = vmatpush2.msra.mxu0 0.0
        %1273 = vmatprep.mubr.f32.mxu0 0.0
        %1274 = vmatmul.mubr.f32.gmra.mxu0 %v1207
        %v1275 = vpop.f32.mrf.mxu0
        %v1276 = vadd.f32 0.0, %v1275
        %v1277 = vpop.f32.mrf.mxu0
        %v1278 = vadd.f32 0.0, %v1277
        %1279 = vdwg.mxu0
        %v1281 = vsel %vm1205, %v1040, 0
        %1283 = vmatprep.subr.mxu0 0.0
        %1284 = vmatpush1.msra.mxu0 0.0
        %1285 = vmatprep.subr.mxu0 0.0
        %1286 = vmatpush1.msra.mxu0 0.0
        %1287 = vmatprep.subr.mxu0 0.0
        %1288 = vmatpush1.msra.mxu0 0.0
        %1289 = vmatprep.subr.mxu0 0.0
        %1290 = vmatpush1.msra.mxu0 0.0
        %1291 = vmatprep.subr.mxu0 0.0
        %1292 = vmatpush1.msra.mxu0 0.0
        %1293 = vmatprep.subr.mxu0 0.0
        %1294 = vmatpush1.msra.mxu0 0.0
        %1295 = vmatprep.subr.mxu0 0.0
        %1296 = vmatpush1.msra.mxu0 0.0
        %1297 = vmatprep.subr.mxu0 0.0
        %1298 = vmatpush1.msra.mxu0 0.0
        %1299 = vmatprep.subr.mxu0 0.0
        %1300 = vmatpush1.msra.mxu0 0.0
        %1301 = vmatprep.subr.mxu0 0.0
        %1302 = vmatpush1.msra.mxu0 0.0
        %1303 = vmatprep.subr.mxu0 0.0
        %1304 = vmatpush1.msra.mxu0 0.0
        %1305 = vmatprep.subr.mxu0 0.0
        %1306 = vmatpush1.msra.mxu0 0.0
        %1307 = vmatprep.subr.mxu0 0.0
        %1308 = vmatpush1.msra.mxu0 0.0
        %1309 = vmatprep.subr.mxu0 0.0
        %1310 = vmatpush1.msra.mxu0 0.0
        %1311 = vmatprep.subr.mxu0 %v1200
        %1312 = vmatpush1.msra.mxu0 %v1199
        %1313 = vmatprep.subr.mxu0 %v1198
        %1314 = vmatpush1.msra.mxu0 %v1197
        %1315 = vmatprep.subr.mxu0 0.0
        %1316 = vmatpush2.msra.mxu0 0.0
        %1317 = vmatprep.subr.mxu0 0.0
        %1318 = vmatpush2.msra.mxu0 0.0
        %1319 = vmatprep.subr.mxu0 0.0
        %1320 = vmatpush2.msra.mxu0 0.0
        %1321 = vmatprep.subr.mxu0 0.0
        %1322 = vmatpush2.msra.mxu0 0.0
        %1323 = vmatprep.subr.mxu0 0.0
        %1324 = vmatpush2.msra.mxu0 0.0
        %1325 = vmatprep.subr.mxu0 0.0
        %1326 = vmatpush2.msra.mxu0 0.0
        %1327 = vmatprep.subr.mxu0 0.0
        %1328 = vmatpush2.msra.mxu0 0.0
        %1329 = vmatprep.subr.mxu0 0.0
        %1330 = vmatpush2.msra.mxu0 0.0
        %1331 = vmatprep.subr.mxu0 0.0
        %1332 = vmatpush2.msra.mxu0 0.0
        %1333 = vmatprep.subr.mxu0 0.0
        %1334 = vmatpush2.msra.mxu0 0.0
        %1335 = vmatprep.subr.mxu0 0.0
        %1336 = vmatpush2.msra.mxu0 0.0
        %1337 = vmatprep.subr.mxu0 0.0
        %1338 = vmatpush2.msra.mxu0 0.0
        %1339 = vmatprep.subr.mxu0 0.0
        %1340 = vmatpush2.msra.mxu0 0.0
        %1341 = vmatprep.subr.mxu0 0.0
        %1342 = vmatpush2.msra.mxu0 0.0
        %1343 = vmatprep.subr.mxu0 0.0
        %1344 = vmatpush2.msra.mxu0 0.0
        %1345 = vmatprep.subr.mxu0 0.0
        %1346 = vmatpush2.msra.mxu0 0.0
        %1347 = vmatprep.mubr.f32.mxu0 0.0
        %1348 = vmatmul.mubr.f32.gmra.mxu0 %v1281
        %v1349 = vpop.f32.mrf.mxu0
        %v1350 = vadd.f32 %v1276, %v1349
        %v1351 = vpop.f32.mrf.mxu0
        %v1352 = vadd.f32 %v1278, %v1351
        %1353 = vdwg.mxu0
        %v1354 = vmul.f32 %v544, 0.5
        %v1357 = vcombine.low %v1350, %v1352
        %v1359 = vmul.f32 %v1354, %v1357
        %1360 = vst [vmem:[%s431] sm:$0xff] %v1359
        %s1361 = sand.u32 %s272, 1
        %s1362 = scalar_lea.sflag [#allocation3], %s1361
        %s1363 = sand.u32 %s272, 1
        %s1364 = smul.addr %s1363, 8
        %s1365 = scalar_lea.vmem [#allocation10], %s1364
        // Predicated region
        $region81: #{tpu_custom_call.1} parent=63 // pred_check
          %p1366 = pneg %p282
        $region82: #{tpu_custom_call.1} parent=63 // pred_check_branch
          %1368 = sbr.rel (%p1366) target = $region84
        $region83: #{tpu_custom_call.1} parent=63 // pred_region
          %s1370 = ssub.s32 128, 128
          %1371 = vsyncadd %s1362, %s1370
          %s1372 = smul.addr %s28, 2
          %s1373 = smul.addr %s1372, 64
          %s1374 = scalar_lea.hbm %s11, %s1373
          %s1376 = sshll.u32 %s1365, 4
          %s1377 = int_to_ptr.vmem [resolvable:$true] %s1376
          %1379 = dma.vmem_to_hbm [thread:$0]  %s1377, 128, %s1374, %s1362
        $region84: #{tpu_custom_call.1} parent=63 // pred_fallthru
          _
      $region64: #{tpu_custom_call.1} parent=5 // pred_fallthru
        _
      %p1380 = scmp.le.s32.totalorder 2, %s23
      // Predicated region
      $region85: #{tpu_custom_call.1} parent=5 // pred_check
        %p1381 = pneg %p1380
      $region86: #{tpu_custom_call.1} parent=5 // pred_check_branch
        %1383 = sbr.rel (%p1381) target = $region88
      $region87: #{tpu_custom_call.1} parent=5 // pred_region
        %s1384 = ssub.s32 %s23, 2
        // Predicated region
        $region89: #{tpu_custom_call.1} parent=87 // pred_check
          %p1385 = pneg %p288
        $region90: #{tpu_custom_call.1} parent=87 // pred_check_branch
          %1387 = sbr.rel (%p1385) target = $region92
        $region91: #{tpu_custom_call.1} parent=87 // pred_region
          %s1388 = sand.u32 %s273, 1
          %s1389 = scalar_lea.sflag [#allocation3], %s1388
          %s1390 = sand.u32 %s273, 1
          %s1391 = smul.addr %s1390, 8
          %s1392 = scalar_lea.vmem [#allocation10], %s1391
          %1393 = dma.done %s1389, 128
        $region92: #{tpu_custom_call.1} parent=87 // pred_fallthru
          _
      $region88: #{tpu_custom_call.1} parent=5 // pred_fallthru
        _
    $region6: #{tpu_custom_call.1} parent=1 // loop_footer
      %s27 = sadd.s32 1, %s23
    $region7: #{tpu_custom_call.1} parent=1 // loop_footer_branch
      %22 = sbr.rel target = $region3
    $region8: #{tpu_custom_call.1} parent=1 // loop_exit
      _
    %1394 = vsyncpa [#allocation3], 1
    %s1395 = scalar_lea.sflag [#allocation3], 1
    %1396 = vsyncpa %s1395, 1
    %1397 = vsyncpa [#allocation4], 1
    %s1398 = scalar_lea.sflag [#allocation4], 1
    %1399 = vsyncpa %s1398, 1
    %1400 = vsyncpa [#allocation6], 1
    %1401 = vsyncpa [#allocation9], 1

</llo_original>
